<compile_context>
chip_gen: v7x
topology: tpu7x:2x2x1
jax: 0.10.0
libtpu: 0.0.40
codegen_flags: <defaults>
</compile_context>

<pallas_src>
import functools

import jax
import jax.numpy as jnp
from jax.experimental import pallas as pl
from jax.experimental.pallas import tpu as pltpu


def _resblock_kernel(*refs, h, w, cin, cout, has_proj):
    """One grid step: BT images, full ResBlock forward, everything lane-dense."""
    if has_proj:
        (x_ref, w1_ref, b1_ref, w2_ref, b2_ref, ws_ref, bs_ref,
         o_ref, p1_ref, p2_ref) = refs
    else:
        (x_ref, w1_ref, b1_ref, w2_ref, b2_ref,
         o_ref, p1_ref, p2_ref) = refs
        ws_ref = bs_ref = None

    bt = x_ref.shape[0]
    hw = h * w

    # Pixel-column index along the lane dim (hoisted once; shared by both convs
    # and all images).  Masks kill taps reading across the left/right border.
    col = jax.lax.broadcasted_iota(jnp.int32, (1, hw), 1) % w
    col_masks = {0: col >= 1, 1: None, 2: col <= w - 2}          # keyed by dx

    def build_patch(act, patch_ref, c, base):
        # act: (c, hw) f32 activations of ONE image.  Scatter the nine 3x3 taps
        # into patch_ref[(dy*3+dx)*c : .., base : base+hw] so that a single
        # matmul against the (Cout, 9*c) weight performs the whole conv.
        # Top/bottom padding -> truncated dest range + explicit zero strip;
        # left/right padding -> column mask.  No scratch zero-fill needed.
        for dy in range(3):
            for dx in range(3):
                k = dy * 3 + dx
                shift = (dy - 1) * w + (dx - 1)                  # flat source offset
                lo = max(0, -shift)
                hi = hw - max(0, shift)
                rows = slice(k * c, (k + 1) * c)
                val = act[:, lo + shift:hi + shift]
                mask = col_masks[dx]
                if mask is not None:
                    val = jnp.where(mask[:, lo:hi], val, 0.0)
                patch_ref[rows, base + lo:base + hi] = val.astype(patch_ref.dtype)
                if lo > 0:
                    patch_ref[rows, base:base + lo] = jnp.zeros((c, lo), patch_ref.dtype)
                if hi < hw:
                    patch_ref[rows, base + hi:base + hw] = jnp.zeros((c, hw - hi),
                                                                     patch_ref.dtype)

    # ---- ReLU(x) -> im2col patch for conv1 ----
    for b in range(bt):
        x_b = x_ref[b].astype(jnp.float32)                       # (cin, hw)
        build_patch(jnp.maximum(x_b, 0.0), p1_ref, cin, b * hw)

    # ---- conv1: ONE MXU matmul, f32 accumulation, bias added once ----
    a1 = jnp.dot(w1_ref[...], p1_ref[...], preferred_element_type=jnp.float32)
    a1 = jnp.maximum(a1 + b1_ref[...].astype(jnp.float32), 0.0)  # (cout, bt*hw)

    # ---- ReLU(conv1) -> im2col patch for conv2 ----
    for b in range(bt):
        build_patch(a1[:, b * hw:(b + 1) * hw], p2_ref, cout, b * hw)

    # ---- conv2: ONE MXU matmul ----
    a2 = jnp.dot(w2_ref[...], p2_ref[...], preferred_element_type=jnp.float32)
    a2 = a2 + b2_ref[...].astype(jnp.float32)

    # ---- shortcut + lane-dense store (out block (BT, Cout, H*W)) ----
    for b in range(bt):
        x_b = x_ref[b].astype(jnp.float32)
        if has_proj:
            sc = jnp.dot(ws_ref[...], x_b.astype(ws_ref.dtype),
                         preferred_element_type=jnp.float32)
            sc = sc + bs_ref[...].astype(jnp.float32)
        else:
            sc = x_b                                             # cin == cout
        o_ref[b, :, :] = (a2[:, b * hw:(b + 1) * hw] + sc).astype(o_ref.dtype)


def prepare_resblock_params(params, matmul_dtype=jnp.bfloat16):
    """Hoisted, once-per-model weight layout work (PyTorch OIHW -> MXU layout).

    w1/w2: (Cout, Cin, 3, 3) -> (Cout, 9*Cin), column index (dy*3+dx)*Cin + ci.
    ws:    (Cout, Cin, 1, 1) -> (Cout, Cin).  Biases -> (Cout, 1), kept f32.
    """
    cout, cin = params["w1"].shape[0], params["w1"].shape[1]
    prep = {
        "w1": jnp.transpose(params["w1"], (0, 2, 3, 1))
                 .reshape(cout, 9 * cin).astype(matmul_dtype),
        "b1": params["b1"].reshape(cout, 1).astype(jnp.float32),
        "w2": jnp.transpose(params["w2"], (0, 2, 3, 1))
                 .reshape(cout, 9 * cout).astype(matmul_dtype),
        "b2": params["b2"].reshape(cout, 1).astype(jnp.float32),
    }
    if "ws" in params:
        prep["ws"] = params["ws"].reshape(cout, cin).astype(matmul_dtype)
        prep["bs"] = params["bs"].reshape(cout, 1).astype(jnp.float32)
    return prep


def _pick_batch_tile(n, hw, max_pixels=2048):
    """Largest divisor of n keeping >= min(n,4) grid steps and <= max_pixels/step."""
    min_steps = min(n, 4)
    best = 1
    for d in range(1, n + 1):
        if n % d == 0 and n // d >= min_steps and d * hw <= max_pixels:
            best = d
    return best


def _patch_dtype(channels, matmul_dtype):
    # bf16 patch rows start at sublane offset k*channels; keep that aligned to
    # the 2-row bf16 packing, otherwise fall back to an f32 patch.
    if jnp.dtype(matmul_dtype).itemsize >= 4 or channels % 2 == 0:
        return matmul_dtype
    return jnp.float32


def resblock_forward(x_nchw, prep):
    """Pallas TPU forward of the PyTorch ResBlock.

    x_nchw: (N, Cin, H, W).  `prep` comes from prepare_resblock_params().
    """
    n, cin, h, w = x_nchw.shape
    cout = prep["w1"].shape[0]
    has_proj = "ws" in prep
    if not has_proj and cin != cout:
        raise ValueError("identity shortcut requires in_dim == out_dim")
    hw = h * w
    dtype = x_nchw.dtype
    mm_dtype = prep["w1"].dtype
    p1_dtype = _patch_dtype(cin, mm_dtype)
    p2_dtype = _patch_dtype(cout, mm_dtype)

    bt = _pick_batch_tile(n, hw)
    grid = (n // bt,)

    # Pixels in the lane dim: x block (BT, Cin, H*W), out block (BT, Cout, H*W).
    x = x_nchw.reshape(n, cin, hw)

    inputs = [x, prep["w1"], prep["b1"], prep["w2"], prep["b2"]]
    in_specs = [
        pl.BlockSpec((bt, cin, hw), lambda i: (i, 0, 0)),
        pl.BlockSpec((cout, 9 * cin), lambda i: (0, 0)),
        pl.BlockSpec((cout, 1), lambda i: (0, 0)),
        pl.BlockSpec((cout, 9 * cout), lambda i: (0, 0)),
        pl.BlockSpec((cout, 1), lambda i: (0, 0)),
    ]
    if has_proj:
        inputs += [prep["ws"], prep["bs"]]
        in_specs += [pl.BlockSpec((cout, cin), lambda i: (0, 0)),
                     pl.BlockSpec((cout, 1), lambda i: (0, 0))]

    kernel = functools.partial(_resblock_kernel, h=h, w=w, cin=cin, cout=cout,
                               has_proj=has_proj)

    itemsize = jnp.dtype(dtype).itemsize
    flops = 2 * n * hw * (9 * cin * cout + 9 * cout * cout
                          + (cin * cout if has_proj else 0))
    wgt_bytes = sum(int(v.size) * v.dtype.itemsize for v in prep.values())
    bytes_accessed = itemsize * (int(x.size) + n * cout * hw) + wgt_bytes

    scratch_bytes = (9 * cin * bt * hw * jnp.dtype(p1_dtype).itemsize
                     + 9 * cout * bt * hw * jnp.dtype(p2_dtype).itemsize)
    io_bytes = 2 * bt * (cin + cout) * hw * itemsize             # double-buffered blocks
    vmem_limit = int(min(64 * 2 ** 20,
                         max(32 * 2 ** 20,
                             4 * (scratch_bytes + io_bytes + wgt_bytes))))

    out = pl.pallas_call(
        kernel,
        out_shape=jax.ShapeDtypeStruct((n, cout, hw), dtype),
        grid_spec=pltpu.PrefetchScalarGridSpec(
            num_scalar_prefetch=0,
            grid=grid,                        # independent images -> "parallel"
            in_specs=in_specs,
            out_specs=pl.BlockSpec((bt, cout, hw), lambda i: (i, 0, 0)),
            scratch_shapes=[
                pltpu.VMEM((9 * cin, bt * hw), p1_dtype),    # im2col patch, conv1
                pltpu.VMEM((9 * cout, bt * hw), p2_dtype),   # im2col patch, conv2
            ],
        ),
        compiler_params=pltpu.CompilerParams(
            dimension_semantics=("parallel",),
            vmem_limit_bytes=vmem_limit,
        ),
        cost_estimate=pl.CostEstimate(flops=int(flops), transcendentals=0,
                                      bytes_accessed=int(bytes_accessed)),
    )(*inputs)

    return out.reshape(n, cout, h, w)                            # already NCHW


def _reference_resblock(x, params):
    """Pure-JAX reference matching the PyTorch ResBlock forward (f32)."""
    def conv(t, wgt, bias, pad):
        out = jax.lax.conv_general_dilated(
            t, wgt, window_strides=(1, 1), padding=[(pad, pad), (pad, pad)],
            dimension_numbers=("NCHW", "OIHW", "NCHW"))
        return out + bias.reshape(1, -1, 1, 1)

    shortcut = x if "ws" not in params else conv(x, params["ws"], params["bs"], 0)
    t = jax.nn.relu(x)
    t = conv(t, params["w1"], params["b1"], 1)
    t = jax.nn.relu(t)
    t = conv(t, params["w2"], params["b2"], 1)
    return t + shortcut


def _make_params(key, in_dim, out_dim):
    ks = jax.random.split(key, 6)
    params = {
        "w1": 0.2 * jax.random.normal(ks[0], (out_dim, in_dim, 3, 3), jnp.float32),
        "b1": 0.1 * jax.random.normal(ks[1], (out_dim,), jnp.float32),
        "w2": 0.2 * jax.random.normal(ks[2], (out_dim, out_dim, 3, 3), jnp.float32),
        "b2": 0.1 * jax.random.normal(ks[3], (out_dim,), jnp.float32),
    }
    if in_dim != out_dim:
        params["ws"] = 0.2 * jax.random.normal(ks[4], (out_dim, in_dim, 1, 1), jnp.float32)
        params["bs"] = 0.1 * jax.random.normal(ks[5], (out_dim,), jnp.float32)
    return params


if __name__ == "__main__":
    key = jax.random.PRNGKey(0)
    kx, kp1, kp2, kx2 = jax.random.split(key, 4)

    n, h, w = 2, 16, 16

    # Case 1: in_dim != out_dim -> 1x1 projection shortcut, bf16 MXU operands.
    in_dim, out_dim = 4, 8
    x = jax.random.normal(kx, (n, in_dim, h, w), jnp.float32)
    params = _make_params(kp1, in_dim, out_dim)
    prep_bf16 = prepare_resblock_params(params, matmul_dtype=jnp.bfloat16)
    out = jax.block_until_ready(resblock_forward(x, prep_bf16))
    ref = _reference_resblock(x, params)
    assert out.shape == (n, out_dim, h, w), out.shape
    assert out.dtype == x.dtype
    rel_err = float(jnp.max(jnp.abs(out - ref)) / (jnp.max(jnp.abs(ref)) + 1e-6))
    assert rel_err < 8e-2, f"mismatch (projection shortcut, bf16): rel_err={rel_err}"

    # Case 2: in_dim == out_dim -> identity shortcut, exact f32 MXU path.
    params_id = _make_params(kp2, out_dim, out_dim)
    prep_f32 = prepare_resblock_params(params_id, matmul_dtype=jnp.float32)
    x2 = jax.random.normal(kx2, (n, out_dim, h, w), jnp.float32)
    out2 = jax.block_until_ready(resblock_forward(x2, prep_f32))
    ref2 = _reference_resblock(x2, params_id)
    assert out2.shape == (n, out_dim, h, w), out2.shape
    assert float(jnp.max(jnp.abs(out2 - ref2))) < 2e-4, "mismatch (identity shortcut, f32)"

    print("KERNEL_OK")
</pallas_src>

<mosaic_0001>
module attributes {stable_mosaic.version = 11 : i64} {
  func.func @_resblock_kernel(%arg0: i32, %arg1: memref<1x4x256xf32, #tpu.memory_space<vmem>>, %arg2: memref<8x36xbf16, #tpu.memory_space<vmem>>, %arg3: memref<8x1xf32, #tpu.memory_space<vmem>>, %arg4: memref<8x72xbf16, #tpu.memory_space<vmem>>, %arg5: memref<8x1xf32, #tpu.memory_space<vmem>>, %arg6: memref<8x4xbf16, #tpu.memory_space<vmem>>, %arg7: memref<8x1xf32, #tpu.memory_space<vmem>>, %arg8: memref<1x8x256xf32, #tpu.memory_space<vmem>>, %arg9: memref<36x256xbf16, #tpu.memory_space<vmem>>, %arg10: memref<72x256xbf16, #tpu.memory_space<vmem>>) attributes {dimension_semantics = [#tpu.dimension_semantics<parallel>], iteration_bounds = array<i64: 2>, scalar_prefetch = 0 : i64, scratch_operands = 2 : i64, tpu.core_type = #tpu.core_type<tc>, window_params = [{transform_indices = @transform_0, window_bounds = array<i64: 1, 4, 256>}, {pipeline_mode = #tpu.pipeline_mode<synchronous>, transform_indices = @transform_1, window_bounds = array<i64: 8, 36>}, {pipeline_mode = #tpu.pipeline_mode<synchronous>, transform_indices = @transform_2, window_bounds = array<i64: 8, 1>}, {pipeline_mode = #tpu.pipeline_mode<synchronous>, transform_indices = @transform_3, window_bounds = array<i64: 8, 72>}, {pipeline_mode = #tpu.pipeline_mode<synchronous>, transform_indices = @transform_4, window_bounds = array<i64: 8, 1>}, {pipeline_mode = #tpu.pipeline_mode<synchronous>, transform_indices = @transform_5, window_bounds = array<i64: 8, 4>}, {pipeline_mode = #tpu.pipeline_mode<synchronous>, transform_indices = @transform_6, window_bounds = array<i64: 8, 1>}, {transform_indices = @transform_7, window_bounds = array<i64: 1, 8, 256>}]} {
    %0 = tpu.iota {dimensions = array<i32: 1>} : vector<1x256xi32>
    %c16_i32 = arith.constant 16 : i32
    %c0_i32 = arith.constant 0 : i32
    %1 = arith.cmpi eq, %c16_i32, %c0_i32 : i32
    %c1_i32 = arith.constant 1 : i32
    %2 = arith.select %1, %c1_i32, %c16_i32 : i32
    %3 = vector.broadcast %2 : i32 to vector<1x256xi32>
    %4 = arith.remsi %0, %3 : vector<1x256xi32>
    %c0_i32_0 = arith.constant 0 : i32
    %5 = vector.broadcast %c0_i32_0 : i32 to vector<1x256xi32>
    %6 = arith.cmpi ne, %4, %5 : vector<1x256xi32>
    %c0_i32_1 = arith.constant 0 : i32
    %7 = vector.broadcast %c0_i32_1 : i32 to vector<1x256xi32>
    %8 = arith.cmpi slt, %4, %7 : vector<1x256xi32>
    %c0_i32_2 = arith.constant 0 : i32
    %9 = arith.cmpi slt, %2, %c0_i32_2 : i32
    %10 = vector.broadcast %9 : i1 to vector<1x256xi1>
    %11 = vector.broadcast %10 : vector<1x256xi1> to vector<1x256xi1>
    %12 = arith.xori %8, %11 : vector<1x256xi1>
    %13 = arith.andi %12, %6 : vector<1x256xi1>
    %14 = vector.broadcast %2 : i32 to vector<1x256xi32>
    %15 = arith.addi %4, %14 : vector<1x256xi32>
    %16 = arith.select %13, %15, %4 : vector<1x256xi1>, vector<1x256xi32>
    %c1_i32_3 = arith.constant 1 : i32
    %17 = vector.broadcast %c1_i32_3 : i32 to vector<1x256xi32>
    %18 = arith.cmpi sge, %16, %17 : vector<1x256xi32>
    %c14_i32 = arith.constant 14 : i32
    %19 = vector.broadcast %c14_i32 : i32 to vector<1x256xi32>
    %20 = arith.cmpi sle, %16, %19 : vector<1x256xi32>
    %c0 = arith.constant 0 : index
    %c0_4 = arith.constant 0 : index
    %c0_5 = arith.constant 0 : index
    %21 = vector.load %arg1[%c0, %c0_4, %c0_5] : memref<1x4x256xf32, #tpu.memory_space<vmem>>, vector<1x4x256xf32>
    %22 = vector.shape_cast %21 : vector<1x4x256xf32> to vector<4x256xf32>
    %cst = arith.constant 0.000000e+00 : f32
    %23 = vector.broadcast %cst : f32 to vector<4x256xf32>
    %24 = arith.maximumf %22, %23 : vector<4x256xf32>
    %25 = vector.extract_strided_slice %24 {offsets = [0, 0], sizes = [4, 239], strides = [1, 1]} : vector<4x256xf32> to vector<4x239xf32>
    %26 = vector.extract_strided_slice %18 {offsets = [0, 17], sizes = [1, 239], strides = [1, 1]} : vector<1x256xi1> to vector<1x239xi1>
    %cst_6 = arith.constant 0.000000e+00 : f32
    %27 = vector.shape_cast %26 : vector<1x239xi1> to vector<1x239xi1>
    %28 = vector.broadcast %27 : vector<1x239xi1> to vector<4x239xi1>
    %29 = vector.broadcast %cst_6 : f32 to vector<4x239xf32>
    %30 = arith.select %28, %25, %29 : vector<4x239xi1>, vector<4x239xf32>
    %31 = arith.truncf %30 : vector<4x239xf32> to vector<4x239xbf16>
    %c0_7 = arith.constant 0 : index
    %c17 = arith.constant 17 : index
    %32 = vector.load %arg9[%c0_7, %c17] : memref<36x256xbf16, #tpu.memory_space<vmem>>, vector<4x239xbf16>
    tpu.vector_store %arg9[%c0_7, %c17], %31 {strides = array<i32>} : memref<36x256xbf16, #tpu.memory_space<vmem>>, vector<4x239xbf16>,
    %cst_8 = arith.constant 0.000000e+00 : bf16
    %33 = vector.broadcast %cst_8 : bf16 to vector<4x17xbf16>
    %c0_9 = arith.constant 0 : index
    %c0_10 = arith.constant 0 : index
    %34 = vector.load %arg9[%c0_9, %c0_10] : memref<36x256xbf16, #tpu.memory_space<vmem>>, vector<4x17xbf16>
    tpu.vector_store %arg9[%c0_9, %c0_10], %33 {strides = array<i32>} : memref<36x256xbf16, #tpu.memory_space<vmem>>, vector<4x17xbf16>,
    %35 = vector.extract_strided_slice %24 {offsets = [0, 0], sizes = [4, 240], strides = [1, 1]} : vector<4x256xf32> to vector<4x240xf32>
    %36 = arith.truncf %35 : vector<4x240xf32> to vector<4x240xbf16>
    %c4 = arith.constant 4 : index
    %c16 = arith.constant 16 : index
    %37 = vector.load %arg9[%c4, %c16] : memref<36x256xbf16, #tpu.memory_space<vmem>>, vector<4x240xbf16>
    tpu.vector_store %arg9[%c4, %c16], %36 {strides = array<i32>} : memref<36x256xbf16, #tpu.memory_space<vmem>>, vector<4x240xbf16>,
    %cst_11 = arith.constant 0.000000e+00 : bf16
    %38 = vector.broadcast %cst_11 : bf16 to vector<4x16xbf16>
    %c4_12 = arith.constant 4 : index
    %c0_13 = arith.constant 0 : index
    %39 = vector.load %arg9[%c4_12, %c0_13] : memref<36x256xbf16, #tpu.memory_space<vmem>>, vector<4x16xbf16>
    tpu.vector_store %arg9[%c4_12, %c0_13], %38 {strides = array<i32>} : memref<36x256xbf16, #tpu.memory_space<vmem>>, vector<4x16xbf16>,
    %40 = vector.extract_strided_slice %24 {offsets = [0, 0], sizes = [4, 241], strides = [1, 1]} : vector<4x256xf32> to vector<4x241xf32>
    %41 = vector.extract_strided_slice %20 {offsets = [0, 15], sizes = [1, 241], strides = [1, 1]} : vector<1x256xi1> to vector<1x241xi1>
    %cst_14 = arith.constant 0.000000e+00 : f32
    %42 = vector.shape_cast %41 : vector<1x241xi1> to vector<1x241xi1>
    %43 = vector.broadcast %42 : vector<1x241xi1> to vector<4x241xi1>
    %44 = vector.broadcast %cst_14 : f32 to vector<4x241xf32>
    %45 = arith.select %43, %40, %44 : vector<4x241xi1>, vector<4x241xf32>
    %46 = arith.truncf %45 : vector<4x241xf32> to vector<4x241xbf16>
    %c8 = arith.constant 8 : index
    %c15 = arith.constant 15 : index
    %47 = vector.load %arg9[%c8, %c15] : memref<36x256xbf16, #tpu.memory_space<vmem>>, vector<4x241xbf16>
    tpu.vector_store %arg9[%c8, %c15], %46 {strides = array<i32>} : memref<36x256xbf16, #tpu.memory_space<vmem>>, vector<4x241xbf16>,
    %cst_15 = arith.constant 0.000000e+00 : bf16
    %48 = vector.broadcast %cst_15 : bf16 to vector<4x15xbf16>
    %c8_16 = arith.constant 8 : index
    %c0_17 = arith.constant 0 : index
    %49 = vector.load %arg9[%c8_16, %c0_17] : memref<36x256xbf16, #tpu.memory_space<vmem>>, vector<4x15xbf16>
    tpu.vector_store %arg9[%c8_16, %c0_17], %48 {strides = array<i32>} : memref<36x256xbf16, #tpu.memory_space<vmem>>, vector<4x15xbf16>,
    %50 = vector.extract_strided_slice %24 {offsets = [0, 0], sizes = [4, 255], strides = [1, 1]} : vector<4x256xf32> to vector<4x255xf32>
    %51 = vector.extract_strided_slice %18 {offsets = [0, 1], sizes = [1, 255], strides = [1, 1]} : vector<1x256xi1> to vector<1x255xi1>
    %cst_18 = arith.constant 0.000000e+00 : f32
    %52 = vector.shape_cast %51 : vector<1x255xi1> to vector<1x255xi1>
    %53 = vector.broadcast %52 : vector<1x255xi1> to vector<4x255xi1>
    %54 = vector.broadcast %cst_18 : f32 to vector<4x255xf32>
    %55 = arith.select %53, %50, %54 : vector<4x255xi1>, vector<4x255xf32>
    %56 = arith.truncf %55 : vector<4x255xf32> to vector<4x255xbf16>
    %c12 = arith.constant 12 : index
    %c1 = arith.constant 1 : index
    %57 = vector.load %arg9[%c12, %c1] : memref<36x256xbf16, #tpu.memory_space<vmem>>, vector<4x255xbf16>
    tpu.vector_store %arg9[%c12, %c1], %56 {strides = array<i32>} : memref<36x256xbf16, #tpu.memory_space<vmem>>, vector<4x255xbf16>,
    %cst_19 = arith.constant 0.000000e+00 : bf16
    %58 = vector.broadcast %cst_19 : bf16 to vector<4x1xbf16>
    %c12_20 = arith.constant 12 : index
    %c0_21 = arith.constant 0 : index
    %59 = vector.load %arg9[%c12_20, %c0_21] : memref<36x256xbf16, #tpu.memory_space<vmem>>, vector<4x1xbf16>
    tpu.vector_store %arg9[%c12_20, %c0_21], %58 {strides = array<i32>} : memref<36x256xbf16, #tpu.memory_space<vmem>>, vector<4x1xbf16>,
    %60 = arith.truncf %24 : vector<4x256xf32> to vector<4x256xbf16>
    %c16_22 = arith.constant 16 : index
    %c0_23 = arith.constant 0 : index
    %61 = vector.load %arg9[%c16_22, %c0_23] : memref<36x256xbf16, #tpu.memory_space<vmem>>, vector<4x256xbf16>
    tpu.vector_store %arg9[%c16_22, %c0_23], %60 {strides = array<i32>} : memref<36x256xbf16, #tpu.memory_space<vmem>>, vector<4x256xbf16>,
    %62 = vector.extract_strided_slice %24 {offsets = [0, 1], sizes = [4, 255], strides = [1, 1]} : vector<4x256xf32> to vector<4x255xf32>
    %63 = vector.extract_strided_slice %20 {offsets = [0, 0], sizes = [1, 255], strides = [1, 1]} : vector<1x256xi1> to vector<1x255xi1>
    %cst_24 = arith.constant 0.000000e+00 : f32
    %64 = vector.shape_cast %63 : vector<1x255xi1> to vector<1x255xi1>
    %65 = vector.broadcast %64 : vector<1x255xi1> to vector<4x255xi1>
    %66 = vector.broadcast %cst_24 : f32 to vector<4x255xf32>
    %67 = arith.select %65, %62, %66 : vector<4x255xi1>, vector<4x255xf32>
    %68 = arith.truncf %67 : vector<4x255xf32> to vector<4x255xbf16>
    %c20 = arith.constant 20 : index
    %c0_25 = arith.constant 0 : index
    %69 = vector.load %arg9[%c20, %c0_25] : memref<36x256xbf16, #tpu.memory_space<vmem>>, vector<4x255xbf16>
    tpu.vector_store %arg9[%c20, %c0_25], %68 {strides = array<i32>} : memref<36x256xbf16, #tpu.memory_space<vmem>>, vector<4x255xbf16>,
    %cst_26 = arith.constant 0.000000e+00 : bf16
    %70 = vector.broadcast %cst_26 : bf16 to vector<4x1xbf16>
    %c20_27 = arith.constant 20 : index
    %c255 = arith.constant 255 : index
    %71 = vector.load %arg9[%c20_27, %c255] : memref<36x256xbf16, #tpu.memory_space<vmem>>, vector<4x1xbf16>
    tpu.vector_store %arg9[%c20_27, %c255], %70 {strides = array<i32>} : memref<36x256xbf16, #tpu.memory_space<vmem>>, vector<4x1xbf16>,
    %72 = vector.extract_strided_slice %24 {offsets = [0, 15], sizes = [4, 241], strides = [1, 1]} : vector<4x256xf32> to vector<4x241xf32>
    %73 = vector.extract_strided_slice %18 {offsets = [0, 0], sizes = [1, 241], strides = [1, 1]} : vector<1x256xi1> to vector<1x241xi1>
    %cst_28 = arith.constant 0.000000e+00 : f32
    %74 = vector.shape_cast %73 : vector<1x241xi1> to vector<1x241xi1>
    %75 = vector.broadcast %74 : vector<1x241xi1> to vector<4x241xi1>
    %76 = vector.broadcast %cst_28 : f32 to vector<4x241xf32>
    %77 = arith.select %75, %72, %76 : vector<4x241xi1>, vector<4x241xf32>
    %78 = arith.truncf %77 : vector<4x241xf32> to vector<4x241xbf16>
    %c24 = arith.constant 24 : index
    %c0_29 = arith.constant 0 : index
    %79 = vector.load %arg9[%c24, %c0_29] : memref<36x256xbf16, #tpu.memory_space<vmem>>, vector<4x241xbf16>
    tpu.vector_store %arg9[%c24, %c0_29], %78 {strides = array<i32>} : memref<36x256xbf16, #tpu.memory_space<vmem>>, vector<4x241xbf16>,
    %cst_30 = arith.constant 0.000000e+00 : bf16
    %80 = vector.broadcast %cst_30 : bf16 to vector<4x15xbf16>
    %c24_31 = arith.constant 24 : index
    %c241 = arith.constant 241 : index
    %81 = vector.load %arg9[%c24_31, %c241] : memref<36x256xbf16, #tpu.memory_space<vmem>>, vector<4x15xbf16>
    tpu.vector_store %arg9[%c24_31, %c241], %80 {strides = array<i32>} : memref<36x256xbf16, #tpu.memory_space<vmem>>, vector<4x15xbf16>,
    %82 = vector.extract_strided_slice %24 {offsets = [0, 16], sizes = [4, 240], strides = [1, 1]} : vector<4x256xf32> to vector<4x240xf32>
    %83 = arith.truncf %82 : vector<4x240xf32> to vector<4x240xbf16>
    %c28 = arith.constant 28 : index
    %c0_32 = arith.constant 0 : index
    %84 = vector.load %arg9[%c28, %c0_32] : memref<36x256xbf16, #tpu.memory_space<vmem>>, vector<4x240xbf16>
    tpu.vector_store %arg9[%c28, %c0_32], %83 {strides = array<i32>} : memref<36x256xbf16, #tpu.memory_space<vmem>>, vector<4x240xbf16>,
    %cst_33 = arith.constant 0.000000e+00 : bf16
    %85 = vector.broadcast %cst_33 : bf16 to vector<4x16xbf16>
    %c28_34 = arith.constant 28 : index
    %c240 = arith.constant 240 : index
    %86 = vector.load %arg9[%c28_34, %c240] : memref<36x256xbf16, #tpu.memory_space<vmem>>, vector<4x16xbf16>
    tpu.vector_store %arg9[%c28_34, %c240], %85 {strides = array<i32>} : memref<36x256xbf16, #tpu.memory_space<vmem>>, vector<4x16xbf16>,
    %87 = vector.extract_strided_slice %24 {offsets = [0, 17], sizes = [4, 239], strides = [1, 1]} : vector<4x256xf32> to vector<4x239xf32>
    %88 = vector.extract_strided_slice %20 {offsets = [0, 0], sizes = [1, 239], strides = [1, 1]} : vector<1x256xi1> to vector<1x239xi1>
    %cst_35 = arith.constant 0.000000e+00 : f32
    %89 = vector.shape_cast %88 : vector<1x239xi1> to vector<1x239xi1>
    %90 = vector.broadcast %89 : vector<1x239xi1> to vector<4x239xi1>
    %91 = vector.broadcast %cst_35 : f32 to vector<4x239xf32>
    %92 = arith.select %90, %87, %91 : vector<4x239xi1>, vector<4x239xf32>
    %93 = arith.truncf %92 : vector<4x239xf32> to vector<4x239xbf16>
    %c32 = arith.constant 32 : index
    %c0_36 = arith.constant 0 : index
    %94 = vector.load %arg9[%c32, %c0_36] : memref<36x256xbf16, #tpu.memory_space<vmem>>, vector<4x239xbf16>
    tpu.vector_store %arg9[%c32, %c0_36], %93 {strides = array<i32>} : memref<36x256xbf16, #tpu.memory_space<vmem>>, vector<4x239xbf16>,
    %cst_37 = arith.constant 0.000000e+00 : bf16
    %95 = vector.broadcast %cst_37 : bf16 to vector<4x17xbf16>
    %c32_38 = arith.constant 32 : index
    %c239 = arith.constant 239 : index
    %96 = vector.load %arg9[%c32_38, %c239] : memref<36x256xbf16, #tpu.memory_space<vmem>>, vector<4x17xbf16>
    tpu.vector_store %arg9[%c32_38, %c239], %95 {strides = array<i32>} : memref<36x256xbf16, #tpu.memory_space<vmem>>, vector<4x17xbf16>,
    %c0_39 = arith.constant 0 : index
    %c0_40 = arith.constant 0 : index
    %97 = vector.load %arg2[%c0_39, %c0_40] : memref<8x36xbf16, #tpu.memory_space<vmem>>, vector<8x36xbf16>
    %c0_41 = arith.constant 0 : index
    %c0_42 = arith.constant 0 : index
    %98 = vector.load %arg9[%c0_41, %c0_42] : memref<36x256xbf16, #tpu.memory_space<vmem>>, vector<36x256xbf16>
    %cst_43 = arith.constant dense<0.000000e+00> : vector<8x256xf32>
    %99 = tpu.matmul %97, %98, %cst_43 {dimension_numbers = #tpu.dot_dimension_numbers<[1], [0], [0], [1], [0, 0, 1, 1], [], []>} : vector<8x36xbf16>, vector<36x256xbf16>, vector<8x256xf32> -> vector<8x256xf32>
    %c0_44 = arith.constant 0 : index
    %c0_45 = arith.constant 0 : index
    %100 = vector.load %arg3[%c0_44, %c0_45] : memref<8x1xf32, #tpu.memory_space<vmem>>, vector<8x1xf32>
    %101 = vector.broadcast %100 : vector<8x1xf32> to vector<8x256xf32>
    %102 = arith.addf %99, %101 : vector<8x256xf32>
    %cst_46 = arith.constant 0.000000e+00 : f32
    %103 = vector.broadcast %cst_46 : f32 to vector<8x256xf32>
    %104 = arith.maximumf %102, %103 : vector<8x256xf32>
    %105 = vector.extract_strided_slice %104 {offsets = [0, 0], sizes = [8, 239], strides = [1, 1]} : vector<8x256xf32> to vector<8x239xf32>
    %106 = vector.extract_strided_slice %18 {offsets = [0, 17], sizes = [1, 239], strides = [1, 1]} : vector<1x256xi1> to vector<1x239xi1>
    %cst_47 = arith.constant 0.000000e+00 : f32
    %107 = vector.shape_cast %106 : vector<1x239xi1> to vector<1x239xi1>
    %108 = vector.broadcast %107 : vector<1x239xi1> to vector<8x239xi1>
    %109 = vector.broadcast %cst_47 : f32 to vector<8x239xf32>
    %110 = arith.select %108, %105, %109 : vector<8x239xi1>, vector<8x239xf32>
    %111 = arith.truncf %110 : vector<8x239xf32> to vector<8x239xbf16>
    %c0_48 = arith.constant 0 : index
    %c17_49 = arith.constant 17 : index
    %112 = vector.load %arg10[%c0_48, %c17_49] : memref<72x256xbf16, #tpu.memory_space<vmem>>, vector<8x239xbf16>
    tpu.vector_store %arg10[%c0_48, %c17_49], %111 {strides = array<i32>} : memref<72x256xbf16, #tpu.memory_space<vmem>>, vector<8x239xbf16>,
    %cst_50 = arith.constant 0.000000e+00 : bf16
    %113 = vector.broadcast %cst_50 : bf16 to vector<8x17xbf16>
    %c0_51 = arith.constant 0 : index
    %c0_52 = arith.constant 0 : index
    %114 = vector.load %arg10[%c0_51, %c0_52] : memref<72x256xbf16, #tpu.memory_space<vmem>>, vector<8x17xbf16>
    tpu.vector_store %arg10[%c0_51, %c0_52], %113 {strides = array<i32>} : memref<72x256xbf16, #tpu.memory_space<vmem>>, vector<8x17xbf16>,
    %115 = vector.extract_strided_slice %104 {offsets = [0, 0], sizes = [8, 240], strides = [1, 1]} : vector<8x256xf32> to vector<8x240xf32>
    %116 = arith.truncf %115 : vector<8x240xf32> to vector<8x240xbf16>
    %c8_53 = arith.constant 8 : index
    %c16_54 = arith.constant 16 : index
    %117 = vector.load %arg10[%c8_53, %c16_54] : memref<72x256xbf16, #tpu.memory_space<vmem>>, vector<8x240xbf16>
    tpu.vector_store %arg10[%c8_53, %c16_54], %116 {strides = array<i32>} : memref<72x256xbf16, #tpu.memory_space<vmem>>, vector<8x240xbf16>,
    %cst_55 = arith.constant 0.000000e+00 : bf16
    %118 = vector.broadcast %cst_55 : bf16 to vector<8x16xbf16>
    %c8_56 = arith.constant 8 : index
    %c0_57 = arith.constant 0 : index
    %119 = vector.load %arg10[%c8_56, %c0_57] : memref<72x256xbf16, #tpu.memory_space<vmem>>, vector<8x16xbf16>
    tpu.vector_store %arg10[%c8_56, %c0_57], %118 {strides = array<i32>} : memref<72x256xbf16, #tpu.memory_space<vmem>>, vector<8x16xbf16>,
    %120 = vector.extract_strided_slice %104 {offsets = [0, 0], sizes = [8, 241], strides = [1, 1]} : vector<8x256xf32> to vector<8x241xf32>
    %121 = vector.extract_strided_slice %20 {offsets = [0, 15], sizes = [1, 241], strides = [1, 1]} : vector<1x256xi1> to vector<1x241xi1>
    %cst_58 = arith.constant 0.000000e+00 : f32
    %122 = vector.shape_cast %121 : vector<1x241xi1> to vector<1x241xi1>
    %123 = vector.broadcast %122 : vector<1x241xi1> to vector<8x241xi1>
    %124 = vector.broadcast %cst_58 : f32 to vector<8x241xf32>
    %125 = arith.select %123, %120, %124 : vector<8x241xi1>, vector<8x241xf32>
    %126 = arith.truncf %125 : vector<8x241xf32> to vector<8x241xbf16>
    %c16_59 = arith.constant 16 : index
    %c15_60 = arith.constant 15 : index
    %127 = vector.load %arg10[%c16_59, %c15_60] : memref<72x256xbf16, #tpu.memory_space<vmem>>, vector<8x241xbf16>
    tpu.vector_store %arg10[%c16_59, %c15_60], %126 {strides = array<i32>} : memref<72x256xbf16, #tpu.memory_space<vmem>>, vector<8x241xbf16>,
    %cst_61 = arith.constant 0.000000e+00 : bf16
    %128 = vector.broadcast %cst_61 : bf16 to vector<8x15xbf16>
    %c16_62 = arith.constant 16 : index
    %c0_63 = arith.constant 0 : index
    %129 = vector.load %arg10[%c16_62, %c0_63] : memref<72x256xbf16, #tpu.memory_space<vmem>>, vector<8x15xbf16>
    tpu.vector_store %arg10[%c16_62, %c0_63], %128 {strides = array<i32>} : memref<72x256xbf16, #tpu.memory_space<vmem>>, vector<8x15xbf16>,
    %130 = vector.extract_strided_slice %104 {offsets = [0, 0], sizes = [8, 255], strides = [1, 1]} : vector<8x256xf32> to vector<8x255xf32>
    %131 = vector.extract_strided_slice %18 {offsets = [0, 1], sizes = [1, 255], strides = [1, 1]} : vector<1x256xi1> to vector<1x255xi1>
    %cst_64 = arith.constant 0.000000e+00 : f32
    %132 = vector.shape_cast %131 : vector<1x255xi1> to vector<1x255xi1>
    %133 = vector.broadcast %132 : vector<1x255xi1> to vector<8x255xi1>
    %134 = vector.broadcast %cst_64 : f32 to vector<8x255xf32>
    %135 = arith.select %133, %130, %134 : vector<8x255xi1>, vector<8x255xf32>
    %136 = arith.truncf %135 : vector<8x255xf32> to vector<8x255xbf16>
    %c24_65 = arith.constant 24 : index
    %c1_66 = arith.constant 1 : index
    %137 = vector.load %arg10[%c24_65, %c1_66] : memref<72x256xbf16, #tpu.memory_space<vmem>>, vector<8x255xbf16>
    tpu.vector_store %arg10[%c24_65, %c1_66], %136 {strides = array<i32>} : memref<72x256xbf16, #tpu.memory_space<vmem>>, vector<8x255xbf16>,
    %cst_67 = arith.constant 0.000000e+00 : bf16
    %138 = vector.broadcast %cst_67 : bf16 to vector<8x1xbf16>
    %c24_68 = arith.constant 24 : index
    %c0_69 = arith.constant 0 : index
    %139 = vector.load %arg10[%c24_68, %c0_69] : memref<72x256xbf16, #tpu.memory_space<vmem>>, vector<8x1xbf16>
    tpu.vector_store %arg10[%c24_68, %c0_69], %138 {strides = array<i32>} : memref<72x256xbf16, #tpu.memory_space<vmem>>, vector<8x1xbf16>,
    %140 = arith.truncf %104 : vector<8x256xf32> to vector<8x256xbf16>
    %c32_70 = arith.constant 32 : index
    %c0_71 = arith.constant 0 : index
    %141 = vector.load %arg10[%c32_70, %c0_71] : memref<72x256xbf16, #tpu.memory_space<vmem>>, vector<8x256xbf16>
    tpu.vector_store %arg10[%c32_70, %c0_71], %140 {strides = array<i32>} : memref<72x256xbf16, #tpu.memory_space<vmem>>, vector<8x256xbf16>,
    %142 = vector.extract_strided_slice %104 {offsets = [0, 1], sizes = [8, 255], strides = [1, 1]} : vector<8x256xf32> to vector<8x255xf32>
    %143 = vector.extract_strided_slice %20 {offsets = [0, 0], sizes = [1, 255], strides = [1, 1]} : vector<1x256xi1> to vector<1x255xi1>
    %cst_72 = arith.constant 0.000000e+00 : f32
    %144 = vector.shape_cast %143 : vector<1x255xi1> to vector<1x255xi1>
    %145 = vector.broadcast %144 : vector<1x255xi1> to vector<8x255xi1>
    %146 = vector.broadcast %cst_72 : f32 to vector<8x255xf32>
    %147 = arith.select %145, %142, %146 : vector<8x255xi1>, vector<8x255xf32>
    %148 = arith.truncf %147 : vector<8x255xf32> to vector<8x255xbf16>
    %c40 = arith.constant 40 : index
    %c0_73 = arith.constant 0 : index
    %149 = vector.load %arg10[%c40, %c0_73] : memref<72x256xbf16, #tpu.memory_space<vmem>>, vector<8x255xbf16>
    tpu.vector_store %arg10[%c40, %c0_73], %148 {strides = array<i32>} : memref<72x256xbf16, #tpu.memory_space<vmem>>, vector<8x255xbf16>,
    %cst_74 = arith.constant 0.000000e+00 : bf16
    %150 = vector.broadcast %cst_74 : bf16 to vector<8x1xbf16>
    %c40_75 = arith.constant 40 : index
    %c255_76 = arith.constant 255 : index
    %151 = vector.load %arg10[%c40_75, %c255_76] : memref<72x256xbf16, #tpu.memory_space<vmem>>, vector<8x1xbf16>
    tpu.vector_store %arg10[%c40_75, %c255_76], %150 {strides = array<i32>} : memref<72x256xbf16, #tpu.memory_space<vmem>>, vector<8x1xbf16>,
    %152 = vector.extract_strided_slice %104 {offsets = [0, 15], sizes = [8, 241], strides = [1, 1]} : vector<8x256xf32> to vector<8x241xf32>
    %153 = vector.extract_strided_slice %18 {offsets = [0, 0], sizes = [1, 241], strides = [1, 1]} : vector<1x256xi1> to vector<1x241xi1>
    %cst_77 = arith.constant 0.000000e+00 : f32
    %154 = vector.shape_cast %153 : vector<1x241xi1> to vector<1x241xi1>
    %155 = vector.broadcast %154 : vector<1x241xi1> to vector<8x241xi1>
    %156 = vector.broadcast %cst_77 : f32 to vector<8x241xf32>
    %157 = arith.select %155, %152, %156 : vector<8x241xi1>, vector<8x241xf32>
    %158 = arith.truncf %157 : vector<8x241xf32> to vector<8x241xbf16>
    %c48 = arith.constant 48 : index
    %c0_78 = arith.constant 0 : index
    %159 = vector.load %arg10[%c48, %c0_78] : memref<72x256xbf16, #tpu.memory_space<vmem>>, vector<8x241xbf16>
    tpu.vector_store %arg10[%c48, %c0_78], %158 {strides = array<i32>} : memref<72x256xbf16, #tpu.memory_space<vmem>>, vector<8x241xbf16>,
    %cst_79 = arith.constant 0.000000e+00 : bf16
    %160 = vector.broadcast %cst_79 : bf16 to vector<8x15xbf16>
    %c48_80 = arith.constant 48 : index
    %c241_81 = arith.constant 241 : index
    %161 = vector.load %arg10[%c48_80, %c241_81] : memref<72x256xbf16, #tpu.memory_space<vmem>>, vector<8x15xbf16>
    tpu.vector_store %arg10[%c48_80, %c241_81], %160 {strides = array<i32>} : memref<72x256xbf16, #tpu.memory_space<vmem>>, vector<8x15xbf16>,
    %162 = vector.extract_strided_slice %104 {offsets = [0, 16], sizes = [8, 240], strides = [1, 1]} : vector<8x256xf32> to vector<8x240xf32>
    %163 = arith.truncf %162 : vector<8x240xf32> to vector<8x240xbf16>
    %c56 = arith.constant 56 : index
    %c0_82 = arith.constant 0 : index
    %164 = vector.load %arg10[%c56, %c0_82] : memref<72x256xbf16, #tpu.memory_space<vmem>>, vector<8x240xbf16>
    tpu.vector_store %arg10[%c56, %c0_82], %163 {strides = array<i32>} : memref<72x256xbf16, #tpu.memory_space<vmem>>, vector<8x240xbf16>,
    %cst_83 = arith.constant 0.000000e+00 : bf16
    %165 = vector.broadcast %cst_83 : bf16 to vector<8x16xbf16>
    %c56_84 = arith.constant 56 : index
    %c240_85 = arith.constant 240 : index
    %166 = vector.load %arg10[%c56_84, %c240_85] : memref<72x256xbf16, #tpu.memory_space<vmem>>, vector<8x16xbf16>
    tpu.vector_store %arg10[%c56_84, %c240_85], %165 {strides = array<i32>} : memref<72x256xbf16, #tpu.memory_space<vmem>>, vector<8x16xbf16>,
    %167 = vector.extract_strided_slice %104 {offsets = [0, 17], sizes = [8, 239], strides = [1, 1]} : vector<8x256xf32> to vector<8x239xf32>
    %168 = vector.extract_strided_slice %20 {offsets = [0, 0], sizes = [1, 239], strides = [1, 1]} : vector<1x256xi1> to vector<1x239xi1>
    %cst_86 = arith.constant 0.000000e+00 : f32
    %169 = vector.shape_cast %168 : vector<1x239xi1> to vector<1x239xi1>
    %170 = vector.broadcast %169 : vector<1x239xi1> to vector<8x239xi1>
    %171 = vector.broadcast %cst_86 : f32 to vector<8x239xf32>
    %172 = arith.select %170, %167, %171 : vector<8x239xi1>, vector<8x239xf32>
    %173 = arith.truncf %172 : vector<8x239xf32> to vector<8x239xbf16>
    %c64 = arith.constant 64 : index
    %c0_87 = arith.constant 0 : index
    %174 = vector.load %arg10[%c64, %c0_87] : memref<72x256xbf16, #tpu.memory_space<vmem>>, vector<8x239xbf16>
    tpu.vector_store %arg10[%c64, %c0_87], %173 {strides = array<i32>} : memref<72x256xbf16, #tpu.memory_space<vmem>>, vector<8x239xbf16>,
    %cst_88 = arith.constant 0.000000e+00 : bf16
    %175 = vector.broadcast %cst_88 : bf16 to vector<8x17xbf16>
    %c64_89 = arith.constant 64 : index
    %c239_90 = arith.constant 239 : index
    %176 = vector.load %arg10[%c64_89, %c239_90] : memref<72x256xbf16, #tpu.memory_space<vmem>>, vector<8x17xbf16>
    tpu.vector_store %arg10[%c64_89, %c239_90], %175 {strides = array<i32>} : memref<72x256xbf16, #tpu.memory_space<vmem>>, vector<8x17xbf16>,
    %c0_91 = arith.constant 0 : index
    %c0_92 = arith.constant 0 : index
    %177 = vector.load %arg4[%c0_91, %c0_92] : memref<8x72xbf16, #tpu.memory_space<vmem>>, vector<8x72xbf16>
    %c0_93 = arith.constant 0 : index
    %c0_94 = arith.constant 0 : index
    %178 = vector.load %arg10[%c0_93, %c0_94] : memref<72x256xbf16, #tpu.memory_space<vmem>>, vector<72x256xbf16>
    %cst_95 = arith.constant dense<0.000000e+00> : vector<8x256xf32>
    %179 = tpu.matmul %177, %178, %cst_95 {dimension_numbers = #tpu.dot_dimension_numbers<[1], [0], [0], [1], [0, 0, 1, 1], [], []>} : vector<8x72xbf16>, vector<72x256xbf16>, vector<8x256xf32> -> vector<8x256xf32>
    %c0_96 = arith.constant 0 : index
    %c0_97 = arith.constant 0 : index
    %180 = vector.load %arg5[%c0_96, %c0_97] : memref<8x1xf32, #tpu.memory_space<vmem>>, vector<8x1xf32>
    %181 = vector.broadcast %180 : vector<8x1xf32> to vector<8x256xf32>
    %182 = arith.addf %179, %181 : vector<8x256xf32>
    %c0_98 = arith.constant 0 : index
    %c0_99 = arith.constant 0 : index
    %c0_100 = arith.constant 0 : index
    %183 = vector.load %arg1[%c0_98, %c0_99, %c0_100] : memref<1x4x256xf32, #tpu.memory_space<vmem>>, vector<1x4x256xf32>
    %184 = vector.shape_cast %183 : vector<1x4x256xf32> to vector<4x256xf32>
    %c0_101 = arith.constant 0 : index
    %c0_102 = arith.constant 0 : index
    %185 = vector.load %arg6[%c0_101, %c0_102] : memref<8x4xbf16, #tpu.memory_space<vmem>>, vector<8x4xbf16>
    %186 = arith.truncf %184 : vector<4x256xf32> to vector<4x256xbf16>
    %cst_103 = arith.constant dense<0.000000e+00> : vector<8x256xf32>
    %187 = tpu.matmul %185, %186, %cst_103 {dimension_numbers = #tpu.dot_dimension_numbers<[1], [0], [0], [1], [0, 0, 1, 1], [], []>} : vector<8x4xbf16>, vector<4x256xbf16>, vector<8x256xf32> -> vector<8x256xf32>
    %c0_104 = arith.constant 0 : index
    %c0_105 = arith.constant 0 : index
    %188 = vector.load %arg7[%c0_104, %c0_105] : memref<8x1xf32, #tpu.memory_space<vmem>>, vector<8x1xf32>
    %189 = vector.broadcast %188 : vector<8x1xf32> to vector<8x256xf32>
    %190 = arith.addf %187, %189 : vector<8x256xf32>
    %191 = arith.addf %182, %190 : vector<8x256xf32>
    %c0_106 = arith.constant 0 : index
    %c0_107 = arith.constant 0 : index
    %c0_108 = arith.constant 0 : index
    %192 = vector.load %arg8[%c0_106, %c0_107, %c0_108] : memref<1x8x256xf32, #tpu.memory_space<vmem>>, vector<1x8x256xf32>
    %193 = vector.shape_cast %192 : vector<1x8x256xf32> to vector<8x256xf32>
    %194 = vector.shape_cast %191 : vector<8x256xf32> to vector<1x8x256xf32>
    tpu.vector_store %arg8[%c0_106, %c0_107, %c0_108], %194 {strides = array<i32>} : memref<1x8x256xf32, #tpu.memory_space<vmem>>, vector<1x8x256xf32>,
    return
  }
  func.func @transform_0(%arg0: i32) -> (i32, i32, i32) {
    %c0_i32 = arith.constant 0 : i32
    %c0_i32_0 = arith.constant 0 : i32
    %c0_i32_1 = arith.constant 0 : i32
    return %arg0, %c0_i32, %c0_i32_0 : i32, i32, i32
  }
  func.func @transform_1(%arg0: i32) -> (i32, i32) {
    %c0_i32 = arith.constant 0 : i32
    %c0_i32_0 = arith.constant 0 : i32
    %c0_i32_1 = arith.constant 0 : i32
    return %c0_i32, %c0_i32_0 : i32, i32
  }
  func.func @transform_2(%arg0: i32) -> (i32, i32) {
    %c0_i32 = arith.constant 0 : i32
    %c0_i32_0 = arith.constant 0 : i32
    %c0_i32_1 = arith.constant 0 : i32
    return %c0_i32, %c0_i32_0 : i32, i32
  }
  func.func @transform_3(%arg0: i32) -> (i32, i32) {
    %c0_i32 = arith.constant 0 : i32
    %c0_i32_0 = arith.constant 0 : i32
    %c0_i32_1 = arith.constant 0 : i32
    return %c0_i32, %c0_i32_0 : i32, i32
  }
  func.func @transform_4(%arg0: i32) -> (i32, i32) {
    %c0_i32 = arith.constant 0 : i32
    %c0_i32_0 = arith.constant 0 : i32
    %c0_i32_1 = arith.constant 0 : i32
    return %c0_i32, %c0_i32_0 : i32, i32
  }
  func.func @transform_5(%arg0: i32) -> (i32, i32) {
    %c0_i32 = arith.constant 0 : i32
    %c0_i32_0 = arith.constant 0 : i32
    %c0_i32_1 = arith.constant 0 : i32
    return %c0_i32, %c0_i32_0 : i32, i32
  }
  func.func @transform_6(%arg0: i32) -> (i32, i32) {
    %c0_i32 = arith.constant 0 : i32
    %c0_i32_0 = arith.constant 0 : i32
    %c0_i32_1 = arith.constant 0 : i32
    return %c0_i32, %c0_i32_0 : i32, i32
  }
  func.func @transform_7(%arg0: i32) -> (i32, i32, i32) {
    %c0_i32 = arith.constant 0 : i32
    %c0_i32_0 = arith.constant 0 : i32
    %c0_i32_1 = arith.constant 0 : i32
    return %arg0, %c0_i32, %c0_i32_0 : i32, i32, i32
  }
}

</mosaic_0001>

<llo_original>
// kernel: tpu_custom_call.1
$region0: #{tpu_custom_call.1}
  #allocation0 [shape = 'u32[]', space=smem, size = 0x4, offset = 0x4, fixed_abs, tag = 'smem constant byte address 0x4 - core index']
  #allocation1 [shape = 'u32[144,128]{1,0:T(1,128)}', space=vmem, size = 0x12000, scoped, tag = 'internal scratch']
  #allocation2 [shape = 'bf16[36,256]{1,0:T(8,128)(2,1)}', space=vmem, size = 0x5000, scoped, tag = 'scratch operand']
  #allocation3 [shape = 'bf16[72,256]{1,0:T(8,128)(2,1)}', space=vmem, size = 0x9000, scoped, tag = 'scratch operand']
  %s0 = inlined_call_operand.vmem [shape: f32[2,4,256], index: 0, kind: input, shape index: {}]
  %s1 = inlined_call_operand.vmem [shape: bf16[8,36], index: 1, kind: input, shape index: {}]
  %s2 = inlined_call_operand.vmem [shape: f32[8,1], index: 2, kind: input, shape index: {}]
  %s3 = inlined_call_operand.vmem [shape: bf16[8,72], index: 3, kind: input, shape index: {}]
  %s4 = inlined_call_operand.vmem [shape: f32[8,1], index: 4, kind: input, shape index: {}]
  %s5 = inlined_call_operand.vmem [shape: bf16[8,4], index: 5, kind: input, shape index: {}]
  %s6 = inlined_call_operand.vmem [shape: f32[8,1], index: 6, kind: input, shape index: {}]
  %s7 = inlined_call_operand.hbm [shape: f32[2,8,256], index: 7, kind: output, shape index: {}]
  %s8 = sld [smem:[#allocation0]]
  $region61: #{tpu_custom_call.1} parent=0
    _
  %s10 = ssub.s32 1, %s8
  %s11 = scalar_select 0, %s10, %s8
  $region1: #{tpu_custom_call.1} parent=0
    #allocation4 [shape = 'u8[16384]{0}', space=vmem, size = 0x4000, scoped, tag = 'output window, operand 0']
    #allocation5 [shape = 's32[2]{0}', space=sflag, size = 0x8, scoped, tag = 'scoped memory for tpu_custom_call.1']
    %12 = vsyncpa [#allocation5], 0
    %s13 = scalar_lea.sflag [#allocation5], 1
    %14 = vsyncpa %s13, 0
    loop: start=0, step=1, limit=4
    $region2: #{tpu_custom_call.1} parent=1 // loop_pre_header
      _
    $region3: #{tpu_custom_call.1} parent=1 // loop_header
      %s16 = sphi 0, %s20
      %p17 = scmp.ge.s32.totalorder %s16, 4
      %s26 = sphi 0, %s28
      %s29 = sphi 0, %s26
      %s30 = sphi 0, %s29
      %s46 = sphi 0, %s30
      %s50 = sphi 0, %s50
      %s52 = sphi 0, %s50
      %s53 = sphi 0, %s52
      %s67 = sphi 0, %s53
      %s71 = sphi 0, %s71
      %s73 = sphi 0, %s71
      %s74 = sphi 0, %s73
      %s88 = sphi 0, %s74
      %s92 = sphi 0, %s92
      %s94 = sphi 0, %s92
      %s95 = sphi 0, %s94
      %s109 = sphi 0, %s95
      %s113 = sphi 0, %s113
      %s115 = sphi 0, %s113
      %s116 = sphi 0, %s115
      %s130 = sphi 0, %s116
      %s134 = sphi 0, %s134
      %s136 = sphi 0, %s134
      %s137 = sphi 0, %s136
      %s151 = sphi 0, %s137
      %s155 = sphi 0, %s155
      %s157 = sphi 0, %s155
      %s158 = sphi 0, %s157
      %s172 = sphi 0, %s158
      %s178 = sphi 0, %s180
      %s181 = sphi 0, %s178
      %s182 = sphi 0, %s181
      %s198 = sphi 0, %s182
    $region4: #{tpu_custom_call.1} parent=1 // loop_header_branch
      %19 = sbr.rel (%p17) target = $region8
    $region5: #{tpu_custom_call.1} parent=1 // loop_body
      %s21 = ssub.s32 %s16, 1
      %s22 = ssub.s32 %s16, 2
      %s23 = sadd.s32 %s16, 1
      %s24 = ssub.s32 %s16, %s23
      %p25 = scmp.eq.s32.totalorder %s24, 0
      %s27 = sadd.s32 %s26, 1
      %s28 = scalar_select %p25, %s26, %s27
      %p31 = pneg %p25
      %p32 = scmp.eq.s32.totalorder %s16, 1
      %p33 = por %p31, %p32
      %p34 = scmp.ne.s32.totalorder %s26, %s29
      %p35 = scmp.eq.s32.totalorder %s16, 0
      %p36 = por %p34, %p35
      %p37 = scmp.ne.s32.totalorder %s26, %s29
      %p38 = scmp.eq.s32.totalorder %s21, 1
      %p39 = por %p37, %p38
      %p40 = scmp.ne.s32.totalorder %s29, %s30
      %p41 = scmp.eq.s32.totalorder %s21, 0
      %p42 = por %p40, %p41
      %p43 = scmp.ne.s32.totalorder %s29, %s30
      %p44 = scmp.eq.s32.totalorder %s22, 1
      %p45 = por %p43, %p44
      %p47 = scmp.ne.s32.totalorder %s30, %s46
      %p48 = scmp.eq.s32.totalorder %s22, 0
      %p49 = por %p47, %p48
      %s51 = sadd.s32 %s50, 1
      %p54 = scmp.eq.s32.totalorder %s16, 1
      %p55 = scmp.ne.s32.totalorder %s50, %s52
      %p56 = scmp.eq.s32.totalorder %s16, 0
      %p57 = por %p55, %p56
      %p58 = scmp.ne.s32.totalorder %s50, %s52
      %p59 = scmp.eq.s32.totalorder %s21, 1
      %p60 = por %p58, %p59
      %p61 = scmp.ne.s32.totalorder %s52, %s53
      %p62 = scmp.eq.s32.totalorder %s21, 0
      %p63 = por %p61, %p62
      %p64 = scmp.ne.s32.totalorder %s52, %s53
      %p65 = scmp.eq.s32.totalorder %s22, 1
      %p66 = por %p64, %p65
      %p68 = scmp.ne.s32.totalorder %s53, %s67
      %p69 = scmp.eq.s32.totalorder %s22, 0
      %p70 = por %p68, %p69
      %s72 = sadd.s32 %s71, 1
      %p75 = scmp.eq.s32.totalorder %s16, 1
      %p76 = scmp.ne.s32.totalorder %s71, %s73
      %p77 = scmp.eq.s32.totalorder %s16, 0
      %p78 = por %p76, %p77
      %p79 = scmp.ne.s32.totalorder %s71, %s73
      %p80 = scmp.eq.s32.totalorder %s21, 1
      %p81 = por %p79, %p80
      %p82 = scmp.ne.s32.totalorder %s73, %s74
      %p83 = scmp.eq.s32.totalorder %s21, 0
      %p84 = por %p82, %p83
      %p85 = scmp.ne.s32.totalorder %s73, %s74
      %p86 = scmp.eq.s32.totalorder %s22, 1
      %p87 = por %p85, %p86
      %p89 = scmp.ne.s32.totalorder %s74, %s88
      %p90 = scmp.eq.s32.totalorder %s22, 0
      %p91 = por %p89, %p90
      %s93 = sadd.s32 %s92, 1
      %p96 = scmp.eq.s32.totalorder %s16, 1
      %p97 = scmp.ne.s32.totalorder %s92, %s94
      %p98 = scmp.eq.s32.totalorder %s16, 0
      %p99 = por %p97, %p98
      %p100 = scmp.ne.s32.totalorder %s92, %s94
      %p101 = scmp.eq.s32.totalorder %s21, 1
      %p102 = por %p100, %p101
      %p103 = scmp.ne.s32.totalorder %s94, %s95
      %p104 = scmp.eq.s32.totalorder %s21, 0
      %p105 = por %p103, %p104
      %p106 = scmp.ne.s32.totalorder %s94, %s95
      %p107 = scmp.eq.s32.totalorder %s22, 1
      %p108 = por %p106, %p107
      %p110 = scmp.ne.s32.totalorder %s95, %s109
      %p111 = scmp.eq.s32.totalorder %s22, 0
      %p112 = por %p110, %p111
      %s114 = sadd.s32 %s113, 1
      %p117 = scmp.eq.s32.totalorder %s16, 1
      %p118 = scmp.ne.s32.totalorder %s113, %s115
      %p119 = scmp.eq.s32.totalorder %s16, 0
      %p120 = por %p118, %p119
      %p121 = scmp.ne.s32.totalorder %s113, %s115
      %p122 = scmp.eq.s32.totalorder %s21, 1
      %p123 = por %p121, %p122
      %p124 = scmp.ne.s32.totalorder %s115, %s116
      %p125 = scmp.eq.s32.totalorder %s21, 0
      %p126 = por %p124, %p125
      %p127 = scmp.ne.s32.totalorder %s115, %s116
      %p128 = scmp.eq.s32.totalorder %s22, 1
      %p129 = por %p127, %p128
      %p131 = scmp.ne.s32.totalorder %s116, %s130
      %p132 = scmp.eq.s32.totalorder %s22, 0
      %p133 = por %p131, %p132
      %s135 = sadd.s32 %s134, 1
      %p138 = scmp.eq.s32.totalorder %s16, 1
      %p139 = scmp.ne.s32.totalorder %s134, %s136
      %p140 = scmp.eq.s32.totalorder %s16, 0
      %p141 = por %p139, %p140
      %p142 = scmp.ne.s32.totalorder %s134, %s136
      %p143 = scmp.eq.s32.totalorder %s21, 1
      %p144 = por %p142, %p143
      %p145 = scmp.ne.s32.totalorder %s136, %s137
      %p146 = scmp.eq.s32.totalorder %s21, 0
      %p147 = por %p145, %p146
      %p148 = scmp.ne.s32.totalorder %s136, %s137
      %p149 = scmp.eq.s32.totalorder %s22, 1
      %p150 = por %p148, %p149
      %p152 = scmp.ne.s32.totalorder %s137, %s151
      %p153 = scmp.eq.s32.totalorder %s22, 0
      %p154 = por %p152, %p153
      %s156 = sadd.s32 %s155, 1
      %p159 = scmp.eq.s32.totalorder %s16, 1
      %p160 = scmp.ne.s32.totalorder %s155, %s157
      %p161 = scmp.eq.s32.totalorder %s16, 0
      %p162 = por %p160, %p161
      %p163 = scmp.ne.s32.totalorder %s155, %s157
      %p164 = scmp.eq.s32.totalorder %s21, 1
      %p165 = por %p163, %p164
      %p166 = scmp.ne.s32.totalorder %s157, %s158
      %p167 = scmp.eq.s32.totalorder %s21, 0
      %p168 = por %p166, %p167
      %p169 = scmp.ne.s32.totalorder %s157, %s158
      %p170 = scmp.eq.s32.totalorder %s22, 1
      %p171 = por %p169, %p170
      %p173 = scmp.ne.s32.totalorder %s158, %s172
      %p174 = scmp.eq.s32.totalorder %s22, 0
      %p175 = por %p173, %p174
      %s176 = ssub.s32 %s16, %s23
      %p177 = scmp.eq.s32.totalorder %s176, 0
      %s179 = sadd.s32 %s178, 1
      %s180 = scalar_select %p177, %s178, %s179
      %p183 = pneg %p177
      %p184 = scmp.eq.s32.totalorder %s16, 1
      %p185 = por %p183, %p184
      %p186 = scmp.ne.s32.totalorder %s178, %s181
      %p187 = scmp.eq.s32.totalorder %s16, 0
      %p188 = por %p186, %p187
      %p189 = scmp.ne.s32.totalorder %s178, %s181
      %p190 = scmp.eq.s32.totalorder %s21, 1
      %p191 = por %p189, %p190
      %p192 = scmp.ne.s32.totalorder %s181, %s182
      %p193 = scmp.eq.s32.totalorder %s21, 0
      %p194 = por %p192, %p193
      %p195 = scmp.ne.s32.totalorder %s181, %s182
      %p196 = scmp.eq.s32.totalorder %s22, 1
      %p197 = por %p195, %p196
      %p199 = scmp.ne.s32.totalorder %s182, %s198
      %p200 = scmp.eq.s32.totalorder %s22, 0
      %p201 = por %p199, %p200
      %p202 = scmp.le.s32.totalorder 1, %s16
      %p203 = scmp.lt.s32.totalorder %s16, 3
      %p204 = pnand %p202, %p203
      %p205 = pneg %p204
      // Predicated region
      $region9: #{tpu_custom_call.1} parent=5 // pred_check
        _
      $region10: #{tpu_custom_call.1} parent=5 // pred_check_branch
        %207 = sbr.rel (%p204) target = $region12
      $region11: #{tpu_custom_call.1} parent=5 // pred_region
        %s208 = ssub.s32 %s16, 1
        // Predicated region
        $region13: #{tpu_custom_call.1} parent=11 // pred_check
          %p209 = pneg %p63
        $region14: #{tpu_custom_call.1} parent=11 // pred_check_branch
          %211 = sbr.rel (%p209) target = $region16
        $region15: #{tpu_custom_call.1} parent=11 // pred_region
          _
        $region16: #{tpu_custom_call.1} parent=11 // pred_fallthru
          _
        // Predicated region
        $region17: #{tpu_custom_call.1} parent=11 // pred_check
          %p212 = pneg %p84
        $region18: #{tpu_custom_call.1} parent=11 // pred_check_branch
          %214 = sbr.rel (%p212) target = $region20
        $region19: #{tpu_custom_call.1} parent=11 // pred_region
          _
        $region20: #{tpu_custom_call.1} parent=11 // pred_fallthru
          _
        // Predicated region
        $region21: #{tpu_custom_call.1} parent=11 // pred_check
          %p215 = pneg %p105
        $region22: #{tpu_custom_call.1} parent=11 // pred_check_branch
          %217 = sbr.rel (%p215) target = $region24
        $region23: #{tpu_custom_call.1} parent=11 // pred_region
          _
        $region24: #{tpu_custom_call.1} parent=11 // pred_fallthru
          _
        // Predicated region
        $region25: #{tpu_custom_call.1} parent=11 // pred_check
          %p218 = pneg %p126
        $region26: #{tpu_custom_call.1} parent=11 // pred_check_branch
          %220 = sbr.rel (%p218) target = $region28
        $region27: #{tpu_custom_call.1} parent=11 // pred_region
          _
        $region28: #{tpu_custom_call.1} parent=11 // pred_fallthru
          _
        // Predicated region
        $region29: #{tpu_custom_call.1} parent=11 // pred_check
          %p221 = pneg %p147
        $region30: #{tpu_custom_call.1} parent=11 // pred_check_branch
          %223 = sbr.rel (%p221) target = $region32
        $region31: #{tpu_custom_call.1} parent=11 // pred_region
          _
        $region32: #{tpu_custom_call.1} parent=11 // pred_fallthru
          _
        // Predicated region
        $region33: #{tpu_custom_call.1} parent=11 // pred_check
          %p224 = pneg %p168
        $region34: #{tpu_custom_call.1} parent=11 // pred_check_branch
          %226 = sbr.rel (%p224) target = $region36
        $region35: #{tpu_custom_call.1} parent=11 // pred_region
          _
        $region36: #{tpu_custom_call.1} parent=11 // pred_fallthru
          _
      $region12: #{tpu_custom_call.1} parent=5 // pred_fallthru
        _
      %p227 = scmp.lt.s32.totalorder %s16, 2
      // Predicated region
      $region37: #{tpu_custom_call.1} parent=5 // pred_check
        %p228 = pneg %p227
      $region38: #{tpu_custom_call.1} parent=5 // pred_check_branch
        %230 = sbr.rel (%p228) target = $region40
      $region39: #{tpu_custom_call.1} parent=5 // pred_region
        // Predicated region
        $region41: #{tpu_custom_call.1} parent=39 // pred_check
          %p231 = pneg %p36
        $region42: #{tpu_custom_call.1} parent=39 // pred_check_branch
          %233 = sbr.rel (%p231) target = $region44
        $region43: #{tpu_custom_call.1} parent=39 // pred_region
          %p234 = scmp.lt.s32.totalorder %s16, 1
          %s235 = scalar_select %p234, %s16, 1
          %s236 = smul.addr %s235, 2
          %s237 = smul.addr %s236, 4
          %s238 = scalar_lea.vmem %s0, %s237
        $region44: #{tpu_custom_call.1} parent=39 // pred_fallthru
          _
      $region40: #{tpu_custom_call.1} parent=5 // pred_fallthru
        _
      %p239 = scmp.le.s32.totalorder 1, %s16
      %p240 = scmp.lt.s32.totalorder %s16, 3
      %p241 = pnand %p239, %p240
      %p242 = pneg %p241
      // Predicated region
      $region45: #{tpu_custom_call.1} parent=5 // pred_check
        _
      $region46: #{tpu_custom_call.1} parent=5 // pred_check_branch
        %244 = sbr.rel (%p241) target = $region48
      $region47: #{tpu_custom_call.1} parent=5 // pred_region
        %s245 = ssub.s32 %s16, 1
        %p246 = scmp.lt.s32.totalorder %s21, 1
        %s247 = scalar_select %p246, %s21, 1
        %s248 = smul.addr %s247, 2
        %s249 = smul.addr %s248, 4
        %s250 = scalar_lea.vmem %s0, %s249
        %p251 = pneg %p42
        %p252 = pneg %p39
        %p253 = pneg %p63
        %p254 = pneg %p60
        %p255 = pneg %p84
        %p256 = pneg %p81
        %p257 = pneg %p105
        %p258 = pneg %p102
        %p259 = pneg %p126
        %p260 = pneg %p123
        %p261 = pneg %p147
        %p262 = pneg %p144
        %p263 = pneg %p168
        %p264 = pneg %p165
        %p265 = pneg %p194
        %p266 = pneg %p191
        %s267 = sand.u32 %s181, 1
        %s268 = scalar_lea.sflag [#allocation5], %s267
        %s269 = sand.u32 %s181, 1
        %s270 = smul.addr %s269, 16
        %s271 = scalar_lea.vmem [#allocation4], %s270
        %p272 = scmp.lt.s32.totalorder %s21, 1
        %s273 = scalar_select %p272, %s21, 1
        %s274 = smul.addr %s273, 2
        %s275 = smul.addr %s274, 4
        %s276 = scalar_lea.vmem %s0, %s275
        %v278 = vlaneseq
        %v279 = vand.u32 %v278, 127
        %v280 = vadd.s32 %v279, 128
        %vm281 = vcmp.lt.s32.totalorder %v279, 0
        %v282 = vsub.s32 0, %v279
        %v283 = vsel %vm281, %v282, %v279
        %v284 = vshrl.u32 %v283, 4
        %v285 = vand.u32 %v283, 15
        %v286 = vsub.s32 0, %v285
        %v287 = vsel %vm281, %v286, %v285
        %vm288 = vcmp.lt.s32.totalorder %v280, 0
        %v289 = vsub.s32 0, %v280
        %v290 = vsel %vm288, %v289, %v280
        %v291 = vshrl.u32 %v290, 4
        %v292 = vand.u32 %v290, 15
        %v293 = vsub.s32 0, %v292
        %v294 = vsel %vm288, %v293, %v292
        %vm295 = vcmp.ne.s32.totalorder %v287, 0
        %vm296 = vcmp.ne.s32.totalorder %v294, 0
        %vm297 = vcmp.lt.s32.totalorder %v287, 0
        %vm298 = vcmp.lt.s32.totalorder %v294, 0
        %vm299 = vmand %vm297, %vm295
        %vm300 = vmand %vm298, %vm296
        %v301 = vadd.s32 %v287, 16
        %v302 = vadd.s32 %v294, 16
        %v303 = vsel %vm299, %v301, %v287
        %v304 = vsel %vm300, %v302, %v294
        %vm305 = vcmp.ge.s32.totalorder %v303, 1
        %vm306 = vcmp.ge.s32.totalorder %v304, 1
        %vm307 = vcmp.le.s32.totalorder %v303, 14
        %vm308 = vcmp.le.s32.totalorder %v304, 14
        %v309 = vld [vmem:[%s276] sm:$0xff]
        %v310 = vmax.f32 %v309, 0.0
        %v311 = vsel %vm305, 1, 0
        %v312 = vsel %vm306, 1, 0
        %vm313 = vcmp.eq.s32.totalorder %v311, 1
        %vm314 = vcmp.eq.s32.totalorder %v312, 1
        %v316 = vcombine.high %v310, %v310
        %317 = vrot.lane.b32.xlu0 %v310, 17
        %v318 = vpop.permute.xlu0 %317
        %319 = vrot.lane.b32.xlu0 %v316, 17
        %v320 = vpop.permute.xlu0 %319
        %vm321 = vcmask 138240
        %v322 = vsel %vm321, %v318, %v320
        %v325 = vsel %vm313, %v318, 0.0
        %v326 = vsel %vm314, %v322, 0.0
        %v327 = vpack.c.bf16 %v325, %v325
        %v328 = vpack.c.bf16 %v326, %v326
        %v331 = vunpack.c.l.b16 %v327
        %v332 = vunpack.c.l.b16 %v328
        %v333 = vpack.c.b16 %v332, %v331
        %vm335 = vcmask 1041544
        %vm336 = vcmask 1045508
        %vm337 = vmor %vm336, %vm335
        %338 = vst.msk [vmem:[#allocation2] sm:$0x33] %vm337, %v333
        %vm339 = vcmask 132096
        %340 = vst.msk [vmem:[#allocation2] sm:$0x3] %vm339, 0
        %v342 = vpack.c.bf16 %v310, %v310
        %v343 = vpack.c.bf16 %v316, %v316
        %v346 = vunpack.c.l.b16 %v342
        %v347 = vunpack.c.l.b16 %v343
        %v348 = vpack.c.b16 %v347, %v346
        %v349 = vrot.slane %v348, 6
        %350 = vrot.lane.b32.xlu0 %v349, 16
        %v351 = vpop.permute.xlu0 %350
        %v352 = vrot.slane %v351, 4
        %vm353 = vcmask 130048
        %v354 = vsel %vm353, %v352, %v351
        %vm356 = vcmask 1043586
        %vm357 = vcmask 1047558
        %vm358 = vmor %vm357, %vm356
        %359 = vst.msk [vmem:[#allocation2] sm:$0xcc] %vm358, %v354
        %vm360 = vcmask 125954
        %361 = vst.msk [vmem:[#allocation2] sm:$0xc] %vm360, 0
        %v362 = vsel %vm307, 1, 0
        %v363 = vsel %vm308, 1, 0
        %vm364 = vcmp.eq.s32.totalorder %v362, 1
        %vm365 = vcmp.eq.s32.totalorder %v363, 1
        %366 = vrot.lane.b32.xlu0 %v310, 15
        %v367 = vpop.permute.xlu0 %366
        %368 = vrot.lane.b32.xlu0 %v316, 15
        %v369 = vpop.permute.xlu0 %368
        %vm370 = vcmask 121856
        %v371 = vsel %vm370, %v367, %v369
        %v374 = vsel %vm364, %v367, 0.0
        %v375 = vsel %vm365, %v371, 0.0
        %v376 = vpack.c.bf16 %v374, %v374
        %v377 = vpack.c.bf16 %v375, %v375
        %v380 = vunpack.c.l.b16 %v376
        %v381 = vunpack.c.l.b16 %v377
        %v382 = vpack.c.b16 %v381, %v380
        %vm384 = vcmask 1041528
        %vm385 = vmor %vm336, %vm384
        %386 = vst.msk [vmem:[#allocation2 + $0x8] sm:$0x33] %vm385, %v382
        %vm387 = vcmask 115712
        %388 = vst.msk [vmem:[#allocation2 + $0x8] sm:$0x3] %vm387, 0
        %389 = vrot.lane.b32.xlu0 %v310, 1
        %v390 = vpop.permute.xlu0 %389
        %391 = vrot.lane.b32.xlu0 %v316, 1
        %v392 = vpop.permute.xlu0 %391
        %vm393 = vcmask 7168
        %v394 = vsel %vm393, %v390, %v392
        %v397 = vsel %vm313, %v390, 0.0
        %v398 = vsel %vm314, %v394, 0.0
        %v399 = vpack.c.bf16 %v397, %v397
        %v400 = vpack.c.bf16 %v398, %v398
        %v403 = vunpack.c.l.b16 %v399
        %v404 = vunpack.c.l.b16 %v400
        %v405 = vpack.c.b16 %v404, %v403
        %v406 = vrot.slane %v405, 6
        %vm408 = vcmask 1043466
        %vm409 = vmor %vm357, %vm408
        %410 = vst.msk [vmem:[#allocation2 + $0x8] sm:$0xcc] %vm409, %v406
        %vm411 = vcmask 3074
        %412 = vst.msk [vmem:[#allocation2 + $0x8] sm:$0xc] %vm411, 0
        %414 = vst [vmem:[#allocation2 + $0x10] sm:$0x33] %v348
        %415 = vrot.lane.b32.xlu0 %v310, 127
        %v416 = vpop.permute.xlu0 %415
        %417 = vrot.lane.b32.xlu0 %v316, 127
        %v418 = vpop.permute.xlu0 %417
        %vm419 = vcmask 1039360
        %v420 = vsel %vm419, %v416, %v418
        %v423 = vsel %vm364, %v420, 0.0
        %v424 = vsel %vm365, %v418, 0.0
        %v425 = vpack.c.bf16 %v423, %v423
        %v426 = vpack.c.bf16 %v424, %v424
        %v429 = vunpack.c.l.b16 %v425
        %v430 = vunpack.c.l.b16 %v426
        %v431 = vpack.c.b16 %v430, %v429
        %v432 = vrot.slane %v431, 6
        %vm434 = vcmask 1043458
        %vm435 = vcmask 1039366
        %vm436 = vmor %vm435, %vm434
        %437 = vst.msk [vmem:[#allocation2 + $0x10] sm:$0xcc] %vm436, %v432
        %vm438 = vcmask 1044474
        %439 = vst.msk [vmem:[#allocation2 + $0x14] sm:$0xc] %vm438, 0
        %440 = vrot.lane.b32.xlu0 %v310, 113
        %v441 = vpop.permute.xlu0 %440
        %442 = vrot.lane.b32.xlu0 %v316, 113
        %v443 = vpop.permute.xlu0 %442
        %vm444 = vcmask 924672
        %v445 = vsel %vm444, %v441, %v443
        %v448 = vsel %vm313, %v445, 0.0
        %v449 = vsel %vm314, %v443, 0.0
        %v450 = vpack.c.bf16 %v448, %v448
        %v451 = vpack.c.bf16 %v449, %v449
        %v454 = vunpack.c.l.b16 %v450
        %v455 = vunpack.c.l.b16 %v451
        %v456 = vpack.c.b16 %v455, %v454
        %vm458 = vcmask 1041408
        %vm459 = vcmask 922628
        %vm460 = vmor %vm459, %vm458
        %461 = vst.msk [vmem:[#allocation2 + $0x18] sm:$0x33] %vm460, %v456
        %vm462 = vcmask 1042312
        %463 = vst.msk [vmem:[#allocation2 + $0x1c] sm:$0x3] %vm462, 0
        %464 = vrot.lane.b32.xlu0 %v349, 112
        %v465 = vpop.permute.xlu0 %464
        %v466 = vrot.slane %v465, 4
        %vm467 = vcmask 916480
        %v468 = vsel %vm467, %v465, %v466
        %vm470 = vcmask 916486
        %vm471 = vmor %vm470, %vm434
        %472 = vst.msk [vmem:[#allocation2 + $0x18] sm:$0xcc] %vm471, %v468
        %vm473 = vcmask 1044354
        %474 = vst.msk [vmem:[#allocation2 + $0x1c] sm:$0xc] %vm473, 0
        %475 = vrot.lane.b32.xlu0 %v310, 111
        %v476 = vpop.permute.xlu0 %475
        %477 = vrot.lane.b32.xlu0 %v316, 111
        %v478 = vpop.permute.xlu0 %477
        %vm479 = vcmask 908288
        %v480 = vsel %vm479, %v476, %v478
        %v483 = vsel %vm364, %v480, 0.0
        %v484 = vsel %vm365, %v478, 0.0
        %v485 = vpack.c.bf16 %v483, %v483
        %v486 = vpack.c.bf16 %v484, %v484
        %v489 = vunpack.c.l.b16 %v485
        %v490 = vunpack.c.l.b16 %v486
        %v491 = vpack.c.b16 %v490, %v489
        %vm493 = vcmask 906244
        %vm494 = vmor %vm493, %vm458
        %495 = vst.msk [vmem:[#allocation2 + $0x20] sm:$0x33] %vm494, %v491
        %vm496 = vcmask 1042296
        %497 = vst.msk [vmem:[#allocation2 + $0x24] sm:$0x3] %vm496, 0
        %v498 = vld [vmem:[%s1] sm:$0xf]
        %v499 = vld [vmem:[#allocation2] sm:$0xff]
        %v500 = vld [vmem:[#allocation2 + $0x8] sm:$0xff]
        %v501 = vld [vmem:[#allocation2 + $0x10] sm:$0xff]
        %v502 = vld [vmem:[#allocation2 + $0x18] sm:$0xff]
        %v503 = vld [vmem:[#allocation2 + $0x20] sm:$0x33]
        %v504 = vld [vmem:[%s2] sm:$0xff]
        %506 = vset.pattern.permute.xlu0 0
        %507 = vperm.xlu0 %506, %v504
        %v508 = vpop.permute.xlu0 %507
        %v515 = vunpack.c.l.b16 %v499
        %v516 = vunpack.c.h.b16 %v499
        %v517 = vunpack.c.l.b16 %v500
        %v518 = vunpack.c.h.b16 %v500
        %v519 = vunpack.c.l.b16 %v501
        %v520 = vunpack.c.h.b16 %v501
        %v521 = vunpack.c.l.b16 %v502
        %v522 = vunpack.c.h.b16 %v502
        %v523 = vunpack.c.l.b16 %v503
        %v524 = vunpack.c.h.b16 %v503
        %v525 = vpack.c.b16 %v517, %v515
        %v526 = vpack.c.b16 %v518, %v516
        %v527 = vpack.c.b16 %v521, %v519
        %v528 = vpack.c.b16 %v522, %v520
        %v529 = vpack.c.b16 %v523, %v523
        %v530 = vpack.c.b16 %v524, %v524
        %vm535 = vcmask 293888
        %v537 = vsel %vm535, %v498, 0
        %v540 = vsel %vm458, %v529, 0
        %v543 = vsel %vm458, %v530, 0
        %545 = vmatprep.subr.bf16.mxu0 %v526
        %546 = vmatpush1.bf16.msra.mxu0 %v525
        %547 = vmatprep.subr.bf16.mxu0 %v528
        %548 = vmatpush1.bf16.msra.mxu0 %v527
        %549 = vmatprep.subr.bf16.mxu0 %v543
        %550 = vmatpush1.bf16.msra.mxu0 %v540
        %551 = vmatprep.subr.bf16.mxu0 0
        %552 = vmatpush1.bf16.msra.mxu0 0
        %553 = vmatprep.subr.bf16.mxu0 0
        %554 = vmatpush1.bf16.msra.mxu0 0
        %555 = vmatprep.subr.bf16.mxu0 0
        %556 = vmatpush1.bf16.msra.mxu0 0
        %557 = vmatprep.subr.bf16.mxu0 0
        %558 = vmatpush1.bf16.msra.mxu0 0
        %559 = vmatprep.subr.bf16.mxu0 0
        %560 = vmatpush1.bf16.msra.mxu0 0
        %561 = vmatprep.subr.bf16.mxu0 0
        %562 = vmatpush1.bf16.msra.mxu0 0
        %563 = vmatprep.subr.bf16.mxu0 0
        %564 = vmatpush1.bf16.msra.mxu0 0
        %565 = vmatprep.subr.bf16.mxu0 0
        %566 = vmatpush1.bf16.msra.mxu0 0
        %567 = vmatprep.subr.bf16.mxu0 0
        %568 = vmatpush1.bf16.msra.mxu0 0
        %569 = vmatprep.subr.bf16.mxu0 0
        %570 = vmatpush1.bf16.msra.mxu0 0
        %571 = vmatprep.subr.bf16.mxu0 0
        %572 = vmatpush1.bf16.msra.mxu0 0
        %573 = vmatprep.subr.bf16.mxu0 0
        %574 = vmatpush1.bf16.msra.mxu0 0
        %575 = vmatprep.subr.bf16.mxu0 0
        %576 = vmatpush1.bf16.msra.mxu0 0
        %577 = vmatprep.mubr.bf16.mxu0 0
        %578 = vmatmul.mubr.bf16.gmra.mrb[0].mxu0 %v537
        %v579 = vpop.f32.mrb[0].mxu0
        %v580 = vadd.f32 %v508, %v579
        %v581 = vpop.f32.mrb[0].mxu0
        %v582 = vadd.f32 %v508, %v581
        %v583 = vpop.f32.mrb[0].mxu0
        %v584 = vpop.f32.mrb[0].mxu0
        %585 = vdwg.mxu0
        %v586 = vmax.f32 %v580, 0.0
        %v587 = vmax.f32 %v582, 0.0
        %590 = vrot.lane.b32.xlu0 %v586, 17
        %v591 = vpop.permute.xlu0 %590
        %592 = vrot.lane.b32.xlu0 %v587, 17
        %v593 = vpop.permute.xlu0 %592
        %v594 = vsel %vm321, %v591, %v593
        %v597 = vsel %vm313, %v591, 0.0
        %v598 = vsel %vm314, %v594, 0.0
        %v599 = vpack.c.bf16 %v597, %v597
        %v600 = vpack.c.bf16 %v598, %v598
        %v603 = vunpack.c.l.b16 %v599
        %v604 = vunpack.c.l.b16 %v600
        %v605 = vpack.c.b16 %v604, %v603
        %vm607 = vcmask 1043592
        %vm608 = vcmask 1047556
        %vm609 = vmor %vm608, %vm607
        %610 = vst.msk [vmem:[#allocation3] sm:$0xff] %vm609, %v605
        %vm611 = vcmask 134144
        %612 = vst.msk [vmem:[#allocation3] sm:$0xf] %vm611, 0
        %v613 = vpack.c.bf16 %v586, %v586
        %v614 = vpack.c.bf16 %v587, %v587
        %v617 = vunpack.c.l.b16 %v613
        %v618 = vunpack.c.l.b16 %v614
        %v619 = vpack.c.b16 %v618, %v617
        %620 = vrot.lane.b32.xlu0 %v619, 16
        %v621 = vpop.permute.xlu0 %620
        %v622 = vrot.slane %v621, 4
        %v623 = vsel %vm353, %v622, %v621
        %vm625 = vcmask 1043584
        %vm626 = vmor %vm608, %vm625
        %627 = vst.msk [vmem:[#allocation3 + $0x8] sm:$0xff] %vm626, %v623
        %vm628 = vcmask 125952
        %629 = vst.msk [vmem:[#allocation3 + $0x8] sm:$0xf] %vm628, 0
        %630 = vrot.lane.b32.xlu0 %v586, 15
        %v631 = vpop.permute.xlu0 %630
        %632 = vrot.lane.b32.xlu0 %v587, 15
        %v633 = vpop.permute.xlu0 %632
        %v634 = vsel %vm370, %v631, %v633
        %v637 = vsel %vm364, %v631, 0.0
        %v638 = vsel %vm365, %v634, 0.0
        %v639 = vpack.c.bf16 %v637, %v637
        %v640 = vpack.c.bf16 %v638, %v638
        %v643 = vunpack.c.l.b16 %v639
        %v644 = vunpack.c.l.b16 %v640
        %v645 = vpack.c.b16 %v644, %v643
        %vm647 = vcmask 1043576
        %vm648 = vmor %vm608, %vm647
        %649 = vst.msk [vmem:[#allocation3 + $0x10] sm:$0xff] %vm648, %v645
        %vm650 = vcmask 117760
        %651 = vst.msk [vmem:[#allocation3 + $0x10] sm:$0xf] %vm650, 0
        %652 = vrot.lane.b32.xlu0 %v586, 1
        %v653 = vpop.permute.xlu0 %652
        %654 = vrot.lane.b32.xlu0 %v587, 1
        %v655 = vpop.permute.xlu0 %654
        %v656 = vsel %vm393, %v653, %v655
        %v659 = vsel %vm313, %v653, 0.0
        %v660 = vsel %vm314, %v656, 0.0
        %v661 = vpack.c.bf16 %v659, %v659
        %v662 = vpack.c.bf16 %v660, %v660
        %v665 = vunpack.c.l.b16 %v661
        %v666 = vunpack.c.l.b16 %v662
        %v667 = vpack.c.b16 %v666, %v665
        %vm669 = vcmask 1043464
        %vm670 = vmor %vm608, %vm669
        %671 = vst.msk [vmem:[#allocation3 + $0x18] sm:$0xff] %vm670, %v667
        %vm672 = vcmask 3072
        %673 = vst.msk [vmem:[#allocation3 + $0x18] sm:$0xf] %vm672, 0
        %675 = vst [vmem:[#allocation3 + $0x20] sm:$0xff] %v619
        %676 = vrot.lane.b32.xlu0 %v586, 127
        %v677 = vpop.permute.xlu0 %676
        %678 = vrot.lane.b32.xlu0 %v587, 127
        %v679 = vpop.permute.xlu0 %678
        %v680 = vsel %vm419, %v677, %v679
        %v683 = vsel %vm364, %v680, 0.0
        %v684 = vsel %vm365, %v679, 0.0
        %v685 = vpack.c.bf16 %v683, %v683
        %v686 = vpack.c.bf16 %v684, %v684
        %v689 = vunpack.c.l.b16 %v685
        %v690 = vunpack.c.l.b16 %v686
        %v691 = vpack.c.b16 %v690, %v689
        %vm693 = vcmask 1043456
        %vm694 = vcmask 1039364
        %vm695 = vmor %vm694, %vm693
        %696 = vst.msk [vmem:[#allocation3 + $0x28] sm:$0xff] %vm695, %v691
        %vm697 = vcmask 1044472
        %698 = vst.msk [vmem:[#allocation3 + $0x2c] sm:$0xf] %vm697, 0
        %699 = vrot.lane.b32.xlu0 %v586, 113
        %v700 = vpop.permute.xlu0 %699
        %701 = vrot.lane.b32.xlu0 %v587, 113
        %v702 = vpop.permute.xlu0 %701
        %v703 = vsel %vm444, %v700, %v702
        %v706 = vsel %vm313, %v703, 0.0
        %v707 = vsel %vm314, %v702, 0.0
        %v708 = vpack.c.bf16 %v706, %v706
        %v709 = vpack.c.bf16 %v707, %v707
        %v712 = vunpack.c.l.b16 %v708
        %v713 = vunpack.c.l.b16 %v709
        %v714 = vpack.c.b16 %v713, %v712
        %vm716 = vcmask 924676
        %vm717 = vmor %vm716, %vm693
        %718 = vst.msk [vmem:[#allocation3 + $0x30] sm:$0xff] %vm717, %v714
        %vm719 = vcmask 1044360
        %720 = vst.msk [vmem:[#allocation3 + $0x34] sm:$0xf] %vm719, 0
        %721 = vrot.lane.b32.xlu0 %v619, 112
        %v722 = vpop.permute.xlu0 %721
        %v723 = vrot.slane %v722, 4
        %v724 = vsel %vm467, %v722, %v723
        %vm726 = vcmask 916484
        %vm727 = vmor %vm726, %vm693
        %728 = vst.msk [vmem:[#allocation3 + $0x38] sm:$0xff] %vm727, %v724
        %vm729 = vcmask 1044352
        %730 = vst.msk [vmem:[#allocation3 + $0x3c] sm:$0xf] %vm729, 0
        %731 = vrot.lane.b32.xlu0 %v586, 111
        %v732 = vpop.permute.xlu0 %731
        %733 = vrot.lane.b32.xlu0 %v587, 111
        %v734 = vpop.permute.xlu0 %733
        %v735 = vsel %vm479, %v732, %v734
        %v738 = vsel %vm364, %v735, 0.0
        %v739 = vsel %vm365, %v734, 0.0
        %v740 = vpack.c.bf16 %v738, %v738
        %v741 = vpack.c.bf16 %v739, %v739
        %v744 = vunpack.c.l.b16 %v740
        %v745 = vunpack.c.l.b16 %v741
        %v746 = vpack.c.b16 %v745, %v744
        %vm748 = vcmask 908292
        %vm749 = vmor %vm748, %vm693
        %750 = vst.msk [vmem:[#allocation3 + $0x40] sm:$0xff] %vm749, %v746
        %vm751 = vcmask 1044344
        %752 = vst.msk [vmem:[#allocation3 + $0x44] sm:$0xf] %vm751, 0
        %v753 = vld [vmem:[%s3] sm:$0xf]
        %v754 = vld [vmem:[#allocation3] sm:$0xff]
        %v755 = vld [vmem:[#allocation3 + $0x8] sm:$0xff]
        %v756 = vld [vmem:[#allocation3 + $0x10] sm:$0xff]
        %v757 = vld [vmem:[#allocation3 + $0x18] sm:$0xff]
        %v758 = vld [vmem:[#allocation3 + $0x20] sm:$0xff]
        %v759 = vld [vmem:[#allocation3 + $0x28] sm:$0xff]
        %v760 = vld [vmem:[#allocation3 + $0x30] sm:$0xff]
        %v761 = vld [vmem:[#allocation3 + $0x38] sm:$0xff]
        %v762 = vld [vmem:[#allocation3 + $0x40] sm:$0xff]
        %v763 = vld [vmem:[%s4] sm:$0xff]
        %765 = vset.pattern.permute.xlu0 0
        %766 = vperm.xlu0 %765, %v763
        %v767 = vpop.permute.xlu0 %766
        %v778 = vunpack.c.l.b16 %v754
        %v779 = vunpack.c.h.b16 %v754
        %v780 = vunpack.c.l.b16 %v755
        %v781 = vunpack.c.h.b16 %v755
        %v782 = vunpack.c.l.b16 %v756
        %v783 = vunpack.c.h.b16 %v756
        %v784 = vunpack.c.l.b16 %v757
        %v785 = vunpack.c.h.b16 %v757
        %v786 = vunpack.c.l.b16 %v758
        %v787 = vunpack.c.h.b16 %v758
        %v788 = vunpack.c.l.b16 %v759
        %v789 = vunpack.c.h.b16 %v759
        %v790 = vunpack.c.l.b16 %v760
        %v791 = vunpack.c.h.b16 %v760
        %v792 = vunpack.c.l.b16 %v761
        %v793 = vunpack.c.h.b16 %v761
        %v794 = vunpack.c.l.b16 %v762
        %v795 = vunpack.c.h.b16 %v762
        %v796 = vpack.c.b16 %v780, %v778
        %v797 = vpack.c.b16 %v781, %v779
        %v798 = vpack.c.b16 %v784, %v782
        %v799 = vpack.c.b16 %v785, %v783
        %v800 = vpack.c.b16 %v788, %v786
        %v801 = vpack.c.b16 %v789, %v787
        %v802 = vpack.c.b16 %v792, %v790
        %v803 = vpack.c.b16 %v793, %v791
        %v804 = vpack.c.b16 %v794, %v794
        %v805 = vpack.c.b16 %v795, %v795
        %vm814 = vcmask 588800
        %v816 = vsel %vm814, %v753, 0
        %v819 = vsel %vm693, %v804, 0
        %v822 = vsel %vm693, %v805, 0
        %824 = vmatprep.subr.bf16.mxu0 %v797
        %825 = vmatpush1.bf16.msra.mxu0 %v796
        %826 = vmatprep.subr.bf16.mxu0 %v799
        %827 = vmatpush1.bf16.msra.mxu0 %v798
        %828 = vmatprep.subr.bf16.mxu0 %v801
        %829 = vmatpush1.bf16.msra.mxu0 %v800
        %830 = vmatprep.subr.bf16.mxu0 %v803
        %831 = vmatpush1.bf16.msra.mxu0 %v802
        %832 = vmatprep.subr.bf16.mxu0 %v822
        %833 = vmatpush1.bf16.msra.mxu0 %v819
        %834 = vmatprep.subr.bf16.mxu0 0
        %835 = vmatpush1.bf16.msra.mxu0 0
        %836 = vmatprep.subr.bf16.mxu0 0
        %837 = vmatpush1.bf16.msra.mxu0 0
        %838 = vmatprep.subr.bf16.mxu0 0
        %839 = vmatpush1.bf16.msra.mxu0 0
        %840 = vmatprep.subr.bf16.mxu0 0
        %841 = vmatpush1.bf16.msra.mxu0 0
        %842 = vmatprep.subr.bf16.mxu0 0
        %843 = vmatpush1.bf16.msra.mxu0 0
        %844 = vmatprep.subr.bf16.mxu0 0
        %845 = vmatpush1.bf16.msra.mxu0 0
        %846 = vmatprep.subr.bf16.mxu0 0
        %847 = vmatpush1.bf16.msra.mxu0 0
        %848 = vmatprep.subr.bf16.mxu0 0
        %849 = vmatpush1.bf16.msra.mxu0 0
        %850 = vmatprep.subr.bf16.mxu0 0
        %851 = vmatpush1.bf16.msra.mxu0 0
        %852 = vmatprep.subr.bf16.mxu0 0
        %853 = vmatpush1.bf16.msra.mxu0 0
        %854 = vmatprep.subr.bf16.mxu0 0
        %855 = vmatpush1.bf16.msra.mxu0 0
        %856 = vmatprep.mubr.bf16.mxu0 0
        %857 = vmatmul.mubr.bf16.gmra.mrb[0].mxu0 %v816
        %v858 = vpop.f32.mrb[0].mxu0
        %v859 = vadd.f32 %v767, %v858
        %v860 = vpop.f32.mrb[0].mxu0
        %v861 = vadd.f32 %v767, %v860
        %v862 = vpop.f32.mrb[0].mxu0
        %v863 = vpop.f32.mrb[0].mxu0
        %864 = vdwg.mxu0
        %v865 = vld [vmem:[%s276] sm:$0xff]
        %v866 = vld [vmem:[%s5] sm:$0xf]
        %v868 = vcombine.high %v865, %v865
        %v870 = vpack.c.bf16 %v865, %v865
        %v871 = vpack.c.bf16 %v868, %v868
        %v872 = vld [vmem:[%s6] sm:$0xff]
        %874 = vset.pattern.permute.xlu0 0
        %875 = vperm.xlu0 %874, %v872
        %v876 = vpop.permute.xlu0 %875
        %vm878 = vcmask 31744
        %v880 = vsel %vm878, %v866, 0
        %v883 = vsel %vm458, %v870, 0
        %v886 = vsel %vm458, %v871, 0
        %888 = vmatprep.subr.bf16.mxu0 %v886
        %889 = vmatpush1.bf16.msra.mxu0 %v883
        %890 = vmatprep.subr.bf16.mxu0 0
        %891 = vmatpush1.bf16.msra.mxu0 0
        %892 = vmatprep.subr.bf16.mxu0 0
        %893 = vmatpush1.bf16.msra.mxu0 0
        %894 = vmatprep.subr.bf16.mxu0 0
        %895 = vmatpush1.bf16.msra.mxu0 0
        %896 = vmatprep.subr.bf16.mxu0 0
        %897 = vmatpush1.bf16.msra.mxu0 0
        %898 = vmatprep.subr.bf16.mxu0 0
        %899 = vmatpush1.bf16.msra.mxu0 0
        %900 = vmatprep.subr.bf16.mxu0 0
        %901 = vmatpush1.bf16.msra.mxu0 0
        %902 = vmatprep.subr.bf16.mxu0 0
        %903 = vmatpush1.bf16.msra.mxu0 0
        %904 = vmatprep.subr.bf16.mxu0 0
        %905 = vmatpush1.bf16.msra.mxu0 0
        %906 = vmatprep.subr.bf16.mxu0 0
        %907 = vmatpush1.bf16.msra.mxu0 0
        %908 = vmatprep.subr.bf16.mxu0 0
        %909 = vmatpush1.bf16.msra.mxu0 0
        %910 = vmatprep.subr.bf16.mxu0 0
        %911 = vmatpush1.bf16.msra.mxu0 0
        %912 = vmatprep.subr.bf16.mxu0 0
        %913 = vmatpush1.bf16.msra.mxu0 0
        %914 = vmatprep.subr.bf16.mxu0 0
        %915 = vmatpush1.bf16.msra.mxu0 0
        %916 = vmatprep.subr.bf16.mxu0 0
        %917 = vmatpush1.bf16.msra.mxu0 0
        %918 = vmatprep.subr.bf16.mxu0 0
        %919 = vmatpush1.bf16.msra.mxu0 0
        %920 = vmatprep.mubr.bf16.mxu0 0
        %921 = vmatmul.mubr.bf16.gmra.mrb[0].mxu0 %v880
        %v922 = vpop.f32.mrb[0].mxu0
        %v923 = vadd.f32 %v876, %v922
        %v924 = vpop.f32.mrb[0].mxu0
        %v925 = vadd.f32 %v876, %v924
        %v926 = vpop.f32.mrb[0].mxu0
        %v927 = vpop.f32.mrb[0].mxu0
        %928 = vdwg.mxu0
        %v929 = vadd.f32 %v859, %v923
        %v930 = vadd.f32 %v861, %v925
        %931 = vst [vmem:[%s271] sm:$0xff] %v929
        %932 = vst [vmem:[%s271 + $0x8] sm:$0xff] %v930
        %s933 = sand.u32 %s181, 1
        %s934 = scalar_lea.sflag [#allocation5], %s933
        %s935 = sand.u32 %s181, 1
        %s936 = smul.addr %s935, 16
        %s937 = scalar_lea.vmem [#allocation4], %s936
        // Predicated region
        $region49: #{tpu_custom_call.1} parent=47 // pred_check
          %p938 = pneg %p191
        $region50: #{tpu_custom_call.1} parent=47 // pred_check_branch
          %940 = sbr.rel (%p938) target = $region52
        $region51: #{tpu_custom_call.1} parent=47 // pred_region
          %s942 = ssub.s32 256, 256
          %943 = vsyncadd %s934, %s942
          %s944 = smul.addr %s21, 2
          %s945 = smul.addr %s944, 128
          %s946 = scalar_lea.hbm %s7, %s945
          %s948 = sshll.u32 %s937, 4
          %s949 = int_to_ptr.vmem [resolvable:$true] %s948
          %951 = dma.vmem_to_hbm [thread:$0]  %s949, 256, %s946, %s934
        $region52: #{tpu_custom_call.1} parent=47 // pred_fallthru
          _
      $region48: #{tpu_custom_call.1} parent=5 // pred_fallthru
        _
      %p952 = scmp.le.s32.totalorder 2, %s16
      // Predicated region
      $region53: #{tpu_custom_call.1} parent=5 // pred_check
        %p953 = pneg %p952
      $region54: #{tpu_custom_call.1} parent=5 // pred_check_branch
        %955 = sbr.rel (%p953) target = $region56
      $region55: #{tpu_custom_call.1} parent=5 // pred_region
        %s956 = ssub.s32 %s16, 2
        // Predicated region
        $region57: #{tpu_custom_call.1} parent=55 // pred_check
          %p957 = pneg %p197
        $region58: #{tpu_custom_call.1} parent=55 // pred_check_branch
          %959 = sbr.rel (%p957) target = $region60
        $region59: #{tpu_custom_call.1} parent=55 // pred_region
          %s960 = sand.u32 %s182, 1
          %s961 = scalar_lea.sflag [#allocation5], %s960
          %s962 = sand.u32 %s182, 1
          %s963 = smul.addr %s962, 16
          %s964 = scalar_lea.vmem [#allocation4], %s963
          %965 = dma.done %s961, 256
        $region60: #{tpu_custom_call.1} parent=55 // pred_fallthru
          _
      $region56: #{tpu_custom_call.1} parent=5 // pred_fallthru
        _
    $region6: #{tpu_custom_call.1} parent=1 // loop_footer
      %s20 = sadd.s32 1, %s16
    $region7: #{tpu_custom_call.1} parent=1 // loop_footer_branch
      %15 = sbr.rel target = $region3
    $region8: #{tpu_custom_call.1} parent=1 // loop_exit
      _
    %966 = vsyncpa [#allocation5], 1
    %s967 = scalar_lea.sflag [#allocation5], 1
    %968 = vsyncpa %s967, 1

</llo_original>
